<compile_context>
chip_gen: v7x
topology: tpu7x:2x2x1
jax: 0.10.0
libtpu: 0.0.40
codegen_flags: <defaults>
</compile_context>

<pallas_src>
import jax
import jax.numpy as jnp
from jax.experimental import pallas as pl
from jax.experimental.pallas import tpu as pltpu


def _round_up(v, m):
    return (v + m - 1) // m * m


# ---------------------------------------------------------------------------
# Fused TCN kernel (all TemporalBlocks, one batch element per grid step)
# ---------------------------------------------------------------------------
def _make_tcn_kernel(layer_meta, L, P, compute_dtype):
    """layer_meta: tuple of (k, d, cin_pad, cout_pad, has_ds) per TemporalBlock."""
    n_layers = len(layer_meta)

    def kernel(*refs):
        pos = 0
        x_ref = refs[pos]; pos += 1
        layer_refs = []
        for (_, _, _, _, has_ds) in layer_meta:
            n = 6 if has_ds else 4
            r = tuple(refs[pos: pos + n])
            if not has_ds:
                r = r + (None, None)
            layer_refs.append(r)
            pos += n
        o_ref = refs[pos]; pos += 1
        act_ref = refs[pos]; pos += 1   # (P+L, W) layer-input activation, rows [P, P+L)
        mid_ref = refs[pos]; pos += 1   # (P+L, W) intra-block activation (after conv1+relu)

        W = act_ref.shape[1]

        # Causal zero prefix (rows [0, P)) — aligned store, executed EVERY grid step.
        # (Never gate this on pl.program_id(0)==0: under megacore each TensorCore has
        #  its own scratch and the second core may never execute step 0.)
        zeros_pre = jnp.zeros((P, W), compute_dtype)
        act_ref[0:P, :] = zeros_pre
        mid_ref[0:P, :] = zeros_pre

        c0_pad = layer_meta[0][2]
        act_ref[P:P + L, :c0_pad] = x_ref[0]          # layer-0 input (compute dtype)

        def causal_conv(src_ref, w_ref, b_ref, k, d, cin_pad):
            # Dilated causal Conv1d (+Chomp1d) as k accumulated (L,cin)x(cin,cout) dots:
            # the zero scratch prefix supplies the causal left padding; tap j reads rows
            # shifted by s=(k-1-j)*d into the past.  Per-tap dots avoid materializing an
            # (L, k*cin) concat temp; the k-1 adds ride the VPU slot.
            # TODO(synk): tap offsets P-s are not sublane-aligned for small dilations;
            # only fix (aligned over-read + pltpu.roll) if the vld/XLU slot saturates,
            # not the MXU — measure the bundle dump first.
            acc = None
            for j in range(k):
                s = (k - 1 - j) * d                   # static shift for tap j
                tap = src_ref[P - s: P - s + L, :cin_pad]
                y = jnp.dot(tap, w_ref[j], preferred_element_type=jnp.float32)
                acc = y if acc is None else acc + y
            return acc + b_ref[...]                    # f32 epilogue (bias stays f32)

        for li, (k, d, cin_pad, cout_pad, has_ds) in enumerate(layer_meta):
            w1, b1, w2, b2, wd, bd = layer_refs[li]
            h1 = jnp.maximum(causal_conv(act_ref, w1, b1, k, d, cin_pad), 0.0)
            # TODO(synk): nn.Dropout after relu1/relu2 is identity in eval mode (no RNG).
            mid_ref[P:P + L, :cout_pad] = h1.astype(compute_dtype)
            h2 = jnp.maximum(causal_conv(mid_ref, w2, b2, k, d, cout_pad), 0.0)
            # Residual re-read from act_ref (still holds the layer input) right before
            # the add — no (L, C) value stays live across the two matmuls.
            x_in = act_ref[P:P + L, :cin_pad]
            if has_ds:
                res = jnp.dot(x_in, wd[...], preferred_element_type=jnp.float32) + bd[...]
            else:
                res = x_in.astype(jnp.float32)
            blk = jnp.maximum(h2 + res, 0.0)           # block's final ReLU (f32 epilogue)
            if li < n_layers - 1:
                act_ref[P:P + L, :cout_pad] = blk.astype(compute_dtype)
            else:
                o_ref[0] = blk.astype(o_ref.dtype)     # write straight to the output tile

    return kernel


# ---------------------------------------------------------------------------
# Host-side weight packing: per-layer channel padding to multiples of 128 lanes
# ---------------------------------------------------------------------------
def pack_params(params, compute_dtype):
    packed = []
    layer_meta = []
    cin = params["input_size"]
    for i, (w1, b1, w2, b2, wd, bd) in enumerate(params["blocks"]):
        k, _, cout = w1.shape
        d = 2 ** i
        has_ds = wd is not None
        if not has_ds:
            assert cin == cout, "identity residual requires n_inputs == n_outputs"
        cin_pad = _round_up(cin, 128)
        cout_pad = _round_up(cout, 128)

        def pad_w(w, ci_p, co_p):      # (k, ci, co) -> (k, ci_p, co_p), compute dtype
            kk, ci, co = w.shape
            return (jnp.zeros((kk, ci_p, co_p), jnp.float32)
                    .at[:, :ci, :co].set(w).astype(compute_dtype))

        def pad_b(b, co_p):            # (1, co) -> (1, co_p), stays f32 (f32 epilogue)
            return jnp.zeros((1, co_p), jnp.float32).at[:, :b.shape[1]].set(b)

        packed += [pad_w(w1, cin_pad, cout_pad), pad_b(b1, cout_pad),
                   pad_w(w2, cout_pad, cout_pad), pad_b(b2, cout_pad)]
        if has_ds:
            wdp = (jnp.zeros((cin_pad, cout_pad), jnp.float32)
                   .at[:cin, :cout].set(wd).astype(compute_dtype))
            packed += [wdp, pad_b(bd, cout_pad)]
        layer_meta.append((k, d, cin_pad, cout_pad, has_ds))
        cin = cout
    return packed, tuple(layer_meta)


# ---------------------------------------------------------------------------
# Full TemporalConvNet forward: (B, C_in, L) -> (B, C_last, L)
# ---------------------------------------------------------------------------
def tcn_forward(x, params, compute_dtype=jnp.bfloat16, out_dtype=jnp.float32):
    B, C0, L = x.shape
    assert C0 == params["input_size"]
    c_last = params["num_channels"][-1]

    packed, layer_meta = pack_params(params, compute_dtype)
    c0_pad = layer_meta[0][2]
    cl_pad = layer_meta[-1][3]
    w_max = max(max(m[2], m[3]) for m in layer_meta)     # scratch lane width

    max_pad = max((k - 1) * d for (k, d, _, _, _) in layer_meta)
    # Causal-pad prefix rows: multiple of 16 so bf16 (16,128) sublane tiles stay aligned.
    P = max(16, _round_up(max_pad, 16))

    # channels-last, channels zero-padded only to the FIRST layer's lane width
    xc = jnp.transpose(x, (0, 2, 1)).astype(jnp.float32)          # (B, L, C0)
    xc = jnp.pad(xc, ((0, 0), (0, 0), (0, c0_pad - C0))).astype(compute_dtype)

    kernel = _make_tcn_kernel(layer_meta, L, P, compute_dtype)

    def _const_idx(nd):
        return lambda b: (0,) * nd

    in_specs = [pl.BlockSpec((1, L, c0_pad), lambda b: (b, 0, 0))]
    # Weights/biases: constant index across the (B,) grid -> single-buffer them
    # (default double buffering would duplicate the whole packed-weight set in VMEM).
    in_specs += [pl.BlockSpec(a.shape, _const_idx(a.ndim),
                              pipeline_mode=pl.Buffered(1)) for a in packed]

    # Explicit VMEM budget: scratch + double-buffered in/out tiles + single-buffered
    # weights, with headroom; never below the default scoped limit.
    cdsz = jnp.dtype(compute_dtype).itemsize
    scratch_bytes = 2 * (P + L) * w_max * cdsz
    io_bytes = 2 * L * (c0_pad * cdsz + cl_pad * jnp.dtype(out_dtype).itemsize)
    weight_bytes = sum(a.size * a.dtype.itemsize for a in packed)
    budget = scratch_bytes + io_bytes + weight_bytes
    vmem_limit = int(min(max(budget * 3 // 2 + (8 << 20), 32 << 20), 100 << 20))

    y = pl.pallas_call(
        kernel,
        out_shape=jax.ShapeDtypeStruct((B, L, cl_pad), out_dtype),
        grid_spec=pltpu.PrefetchScalarGridSpec(
            num_scalar_prefetch=0,
            grid=(B,),
            in_specs=in_specs,
            out_specs=pl.BlockSpec((1, L, cl_pad), lambda b: (b, 0, 0)),
            scratch_shapes=[pltpu.VMEM((P + L, w_max), compute_dtype),
                            pltpu.VMEM((P + L, w_max), compute_dtype)],
        ),
        compiler_params=pltpu.CompilerParams(
            dimension_semantics=("parallel",),
            vmem_limit_bytes=vmem_limit,
        ),
        # TODO(synk): for production-scale L on v7x (64 MiB VMEM), add a sequential
        # L-tile grid axis carrying each layer's last (k-1)*d rows as the next tile's
        # causal prefix (zero-filling would be wrong), and stack several batch rows per
        # grid step along the matmul M dimension when L < 256 to fill the MXU.
    )(xc, *packed)

    y = y[:, :, :c_last]                                          # drop padded lanes
    return jnp.transpose(y, (0, 2, 1))                            # back to (B, C, L)


# ---------------------------------------------------------------------------
# Deterministic parameter init (shapes per the PyTorch module; weights ~ N(0, 0.01))
# ---------------------------------------------------------------------------
def init_params(key, input_size, num_channels, kernel_size):
    blocks = []
    cin = input_size
    for cout in num_channels:
        key, k1, k2, k3, k4, k5, k6 = jax.random.split(key, 7)
        w1 = 0.01 * jax.random.normal(k1, (kernel_size, cin, cout), jnp.float32)
        b1 = 0.01 * jax.random.normal(k2, (1, cout), jnp.float32)
        w2 = 0.01 * jax.random.normal(k3, (kernel_size, cout, cout), jnp.float32)
        b2 = 0.01 * jax.random.normal(k4, (1, cout), jnp.float32)
        if cin != cout:
            wd = 0.01 * jax.random.normal(k5, (cin, cout), jnp.float32)
            bd = 0.01 * jax.random.normal(k6, (1, cout), jnp.float32)
        else:
            wd, bd = None, None
        blocks.append((w1, b1, w2, b2, wd, bd))
        cin = cout
    return {"blocks": blocks, "kernel_size": kernel_size,
            "input_size": input_size, "num_channels": list(num_channels)}


# ---------------------------------------------------------------------------
# Pure-JAX reference (matches the PyTorch TemporalConvNet exactly)
# ---------------------------------------------------------------------------
def ref_forward(x, params):
    k = params["kernel_size"]
    h = x                                                       # (B, C, L)
    for i, (w1, b1, w2, b2, wd, bd) in enumerate(params["blocks"]):
        d = 2 ** i
        pad = (k - 1) * d

        def cconv(inp, w_kio, bias):
            w_oiw = jnp.transpose(w_kio, (2, 1, 0))             # (Cout, Cin, k)
            out = jax.lax.conv_general_dilated(
                inp, w_oiw, window_strides=(1,), padding=[(pad, 0)],
                rhs_dilation=(d,), dimension_numbers=("NCH", "OIH", "NCH"))
            return out + bias[0].reshape(1, -1, 1)

        o1 = jnp.maximum(cconv(h, w1, b1), 0.0)
        o2 = jnp.maximum(cconv(o1, w2, b2), 0.0)
        if wd is None:
            res = h
        else:
            res = jnp.einsum("bcl,co->bol", h, wd) + bd[0].reshape(1, -1, 1)
        h = jnp.maximum(o2 + res, 0.0)
    return h


if __name__ == "__main__":
    # TemporalConvNet config: x is (batch, num_inputs, seq_len), as fed to nn.Conv1d.
    # [8, 8, 16] exercises both downsample and identity residual paths.
    B, INPUT_SIZE, SEQ = 2, 4, 16
    NUM_CHANNELS = [8, 8, 16]
    KERNEL_SIZE = 2

    key = jax.random.PRNGKey(0)
    kx, kp = jax.random.split(key)
    x = jax.random.normal(kx, (B, INPUT_SIZE, SEQ), jnp.float32)
    params = init_params(kp, INPUT_SIZE, NUM_CHANNELS, KERNEL_SIZE)

    ref = jax.block_until_ready(ref_forward(x, params))

    # f32 matmul path (exact check against the conv reference)
    out_f32 = jax.block_until_ready(tcn_forward(x, params, compute_dtype=jnp.float32))
    assert out_f32.shape == (B, NUM_CHANNELS[-1], SEQ), out_f32.shape
    assert jnp.allclose(out_f32, ref, rtol=1e-4, atol=1e-4), \
        float(jnp.max(jnp.abs(out_f32 - ref)))

    # default bf16 matmul operands + bf16 activation scratch (f32 accumulation/epilogue)
    out_bf16 = jax.block_until_ready(tcn_forward(x, params))
    assert out_bf16.shape == out_f32.shape
    assert jnp.allclose(out_bf16, ref, rtol=1e-1, atol=1e-2), \
        float(jnp.max(jnp.abs(out_bf16 - ref)))

    print("KERNEL_OK")
</pallas_src>

<mosaic_0001>
module attributes {stable_mosaic.version = 11 : i64} {
  func.func @kernel(%arg0: i32, %arg1: memref<1x16x128xf32, #tpu.memory_space<vmem>>, %arg2: memref<2x128x128xf32, #tpu.memory_space<vmem>>, %arg3: memref<1x128xf32, #tpu.memory_space<vmem>>, %arg4: memref<2x128x128xf32, #tpu.memory_space<vmem>>, %arg5: memref<1x128xf32, #tpu.memory_space<vmem>>, %arg6: memref<128x128xf32, #tpu.memory_space<vmem>>, %arg7: memref<1x128xf32, #tpu.memory_space<vmem>>, %arg8: memref<2x128x128xf32, #tpu.memory_space<vmem>>, %arg9: memref<1x128xf32, #tpu.memory_space<vmem>>, %arg10: memref<2x128x128xf32, #tpu.memory_space<vmem>>, %arg11: memref<1x128xf32, #tpu.memory_space<vmem>>, %arg12: memref<2x128x128xf32, #tpu.memory_space<vmem>>, %arg13: memref<1x128xf32, #tpu.memory_space<vmem>>, %arg14: memref<2x128x128xf32, #tpu.memory_space<vmem>>, %arg15: memref<1x128xf32, #tpu.memory_space<vmem>>, %arg16: memref<128x128xf32, #tpu.memory_space<vmem>>, %arg17: memref<1x128xf32, #tpu.memory_space<vmem>>, %arg18: memref<1x16x128xf32, #tpu.memory_space<vmem>>, %arg19: memref<32x128xf32, #tpu.memory_space<vmem>>, %arg20: memref<32x128xf32, #tpu.memory_space<vmem>>) attributes {dimension_semantics = [#tpu.dimension_semantics<parallel>], iteration_bounds = array<i64: 2>, scalar_prefetch = 0 : i64, scratch_operands = 2 : i64, tpu.core_type = #tpu.core_type<tc>, window_params = [{transform_indices = @transform_0, window_bounds = array<i64: 1, 16, 128>}, {pipeline_mode = #tpu.pipeline_mode<synchronous>, transform_indices = @transform_1, window_bounds = array<i64: 2, 128, 128>}, {pipeline_mode = #tpu.pipeline_mode<synchronous>, transform_indices = @transform_2, window_bounds = array<i64: 1, 128>}, {pipeline_mode = #tpu.pipeline_mode<synchronous>, transform_indices = @transform_3, window_bounds = array<i64: 2, 128, 128>}, {pipeline_mode = #tpu.pipeline_mode<synchronous>, transform_indices = @transform_4, window_bounds = array<i64: 1, 128>}, {pipeline_mode = #tpu.pipeline_mode<synchronous>, transform_indices = @transform_5, window_bounds = array<i64: 128, 128>}, {pipeline_mode = #tpu.pipeline_mode<synchronous>, transform_indices = @transform_6, window_bounds = array<i64: 1, 128>}, {pipeline_mode = #tpu.pipeline_mode<synchronous>, transform_indices = @transform_7, window_bounds = array<i64: 2, 128, 128>}, {pipeline_mode = #tpu.pipeline_mode<synchronous>, transform_indices = @transform_8, window_bounds = array<i64: 1, 128>}, {pipeline_mode = #tpu.pipeline_mode<synchronous>, transform_indices = @transform_9, window_bounds = array<i64: 2, 128, 128>}, {pipeline_mode = #tpu.pipeline_mode<synchronous>, transform_indices = @transform_10, window_bounds = array<i64: 1, 128>}, {pipeline_mode = #tpu.pipeline_mode<synchronous>, transform_indices = @transform_11, window_bounds = array<i64: 2, 128, 128>}, {pipeline_mode = #tpu.pipeline_mode<synchronous>, transform_indices = @transform_12, window_bounds = array<i64: 1, 128>}, {pipeline_mode = #tpu.pipeline_mode<synchronous>, transform_indices = @transform_13, window_bounds = array<i64: 2, 128, 128>}, {pipeline_mode = #tpu.pipeline_mode<synchronous>, transform_indices = @transform_14, window_bounds = array<i64: 1, 128>}, {pipeline_mode = #tpu.pipeline_mode<synchronous>, transform_indices = @transform_15, window_bounds = array<i64: 128, 128>}, {pipeline_mode = #tpu.pipeline_mode<synchronous>, transform_indices = @transform_16, window_bounds = array<i64: 1, 128>}, {transform_indices = @transform_17, window_bounds = array<i64: 1, 16, 128>}]} {
    %cst = arith.constant 0.000000e+00 : f32
    %0 = vector.broadcast %cst : f32 to vector<16x128xf32>
    %c0 = arith.constant 0 : index
    %c0_0 = arith.constant 0 : index
    %1 = vector.load %arg19[%c0, %c0_0] : memref<32x128xf32, #tpu.memory_space<vmem>>, vector<16x128xf32>
    tpu.vector_store %arg19[%c0, %c0_0], %0 {strides = array<i32>} : memref<32x128xf32, #tpu.memory_space<vmem>>, vector<16x128xf32>,
    %c0_1 = arith.constant 0 : index
    %c0_2 = arith.constant 0 : index
    %2 = vector.load %arg20[%c0_1, %c0_2] : memref<32x128xf32, #tpu.memory_space<vmem>>, vector<16x128xf32>
    tpu.vector_store %arg20[%c0_1, %c0_2], %0 {strides = array<i32>} : memref<32x128xf32, #tpu.memory_space<vmem>>, vector<16x128xf32>,
    %c0_3 = arith.constant 0 : index
    %c0_4 = arith.constant 0 : index
    %c0_5 = arith.constant 0 : index
    %3 = vector.load %arg1[%c0_3, %c0_4, %c0_5] : memref<1x16x128xf32, #tpu.memory_space<vmem>>, vector<1x16x128xf32>
    %4 = vector.shape_cast %3 : vector<1x16x128xf32> to vector<16x128xf32>
    %c16 = arith.constant 16 : index
    %c0_6 = arith.constant 0 : index
    %5 = vector.load %arg19[%c16, %c0_6] : memref<32x128xf32, #tpu.memory_space<vmem>>, vector<16x128xf32>
    tpu.vector_store %arg19[%c16, %c0_6], %4 {strides = array<i32>} : memref<32x128xf32, #tpu.memory_space<vmem>>, vector<16x128xf32>,
    %c15 = arith.constant 15 : index
    %c0_7 = arith.constant 0 : index
    %6 = vector.load %arg19[%c15, %c0_7] : memref<32x128xf32, #tpu.memory_space<vmem>>, vector<16x128xf32>
    %c0_8 = arith.constant 0 : index
    %c0_9 = arith.constant 0 : index
    %c0_10 = arith.constant 0 : index
    %7 = vector.load %arg2[%c0_8, %c0_9, %c0_10] : memref<2x128x128xf32, #tpu.memory_space<vmem>>, vector<1x128x128xf32>
    %8 = vector.shape_cast %7 : vector<1x128x128xf32> to vector<128x128xf32>
    %cst_11 = arith.constant dense<0.000000e+00> : vector<16x128xf32>
    %9 = tpu.matmul %6, %8, %cst_11 {dimension_numbers = #tpu.dot_dimension_numbers<[1], [0], [0], [1], [0, 0, 1, 1], [], []>} : vector<16x128xf32>, vector<128x128xf32>, vector<16x128xf32> -> vector<16x128xf32>
    %c16_12 = arith.constant 16 : index
    %c0_13 = arith.constant 0 : index
    %10 = vector.load %arg19[%c16_12, %c0_13] : memref<32x128xf32, #tpu.memory_space<vmem>>, vector<16x128xf32>
    %c1 = arith.constant 1 : index
    %c0_14 = arith.constant 0 : index
    %c0_15 = arith.constant 0 : index
    %11 = vector.load %arg2[%c1, %c0_14, %c0_15] : memref<2x128x128xf32, #tpu.memory_space<vmem>>, vector<1x128x128xf32>
    %12 = vector.shape_cast %11 : vector<1x128x128xf32> to vector<128x128xf32>
    %cst_16 = arith.constant dense<0.000000e+00> : vector<16x128xf32>
    %13 = tpu.matmul %10, %12, %cst_16 {dimension_numbers = #tpu.dot_dimension_numbers<[1], [0], [0], [1], [0, 0, 1, 1], [], []>} : vector<16x128xf32>, vector<128x128xf32>, vector<16x128xf32> -> vector<16x128xf32>
    %14 = arith.addf %9, %13 : vector<16x128xf32>
    %c0_17 = arith.constant 0 : index
    %c0_18 = arith.constant 0 : index
    %15 = vector.load %arg3[%c0_17, %c0_18] : memref<1x128xf32, #tpu.memory_space<vmem>>, vector<1x128xf32>
    %16 = vector.broadcast %15 : vector<1x128xf32> to vector<16x128xf32>
    %17 = arith.addf %14, %16 : vector<16x128xf32>
    %cst_19 = arith.constant 0.000000e+00 : f32
    %18 = vector.broadcast %cst_19 : f32 to vector<16x128xf32>
    %19 = arith.maximumf %17, %18 : vector<16x128xf32>
    %c16_20 = arith.constant 16 : index
    %c0_21 = arith.constant 0 : index
    %20 = vector.load %arg20[%c16_20, %c0_21] : memref<32x128xf32, #tpu.memory_space<vmem>>, vector<16x128xf32>
    tpu.vector_store %arg20[%c16_20, %c0_21], %19 {strides = array<i32>} : memref<32x128xf32, #tpu.memory_space<vmem>>, vector<16x128xf32>,
    %c15_22 = arith.constant 15 : index
    %c0_23 = arith.constant 0 : index
    %21 = vector.load %arg20[%c15_22, %c0_23] : memref<32x128xf32, #tpu.memory_space<vmem>>, vector<16x128xf32>
    %c0_24 = arith.constant 0 : index
    %c0_25 = arith.constant 0 : index
    %c0_26 = arith.constant 0 : index
    %22 = vector.load %arg4[%c0_24, %c0_25, %c0_26] : memref<2x128x128xf32, #tpu.memory_space<vmem>>, vector<1x128x128xf32>
    %23 = vector.shape_cast %22 : vector<1x128x128xf32> to vector<128x128xf32>
    %cst_27 = arith.constant dense<0.000000e+00> : vector<16x128xf32>
    %24 = tpu.matmul %21, %23, %cst_27 {dimension_numbers = #tpu.dot_dimension_numbers<[1], [0], [0], [1], [0, 0, 1, 1], [], []>} : vector<16x128xf32>, vector<128x128xf32>, vector<16x128xf32> -> vector<16x128xf32>
    %c16_28 = arith.constant 16 : index
    %c0_29 = arith.constant 0 : index
    %25 = vector.load %arg20[%c16_28, %c0_29] : memref<32x128xf32, #tpu.memory_space<vmem>>, vector<16x128xf32>
    %c1_30 = arith.constant 1 : index
    %c0_31 = arith.constant 0 : index
    %c0_32 = arith.constant 0 : index
    %26 = vector.load %arg4[%c1_30, %c0_31, %c0_32] : memref<2x128x128xf32, #tpu.memory_space<vmem>>, vector<1x128x128xf32>
    %27 = vector.shape_cast %26 : vector<1x128x128xf32> to vector<128x128xf32>
    %cst_33 = arith.constant dense<0.000000e+00> : vector<16x128xf32>
    %28 = tpu.matmul %25, %27, %cst_33 {dimension_numbers = #tpu.dot_dimension_numbers<[1], [0], [0], [1], [0, 0, 1, 1], [], []>} : vector<16x128xf32>, vector<128x128xf32>, vector<16x128xf32> -> vector<16x128xf32>
    %29 = arith.addf %24, %28 : vector<16x128xf32>
    %c0_34 = arith.constant 0 : index
    %c0_35 = arith.constant 0 : index
    %30 = vector.load %arg5[%c0_34, %c0_35] : memref<1x128xf32, #tpu.memory_space<vmem>>, vector<1x128xf32>
    %31 = vector.broadcast %30 : vector<1x128xf32> to vector<16x128xf32>
    %32 = arith.addf %29, %31 : vector<16x128xf32>
    %cst_36 = arith.constant 0.000000e+00 : f32
    %33 = vector.broadcast %cst_36 : f32 to vector<16x128xf32>
    %34 = arith.maximumf %32, %33 : vector<16x128xf32>
    %c16_37 = arith.constant 16 : index
    %c0_38 = arith.constant 0 : index
    %35 = vector.load %arg19[%c16_37, %c0_38] : memref<32x128xf32, #tpu.memory_space<vmem>>, vector<16x128xf32>
    %c0_39 = arith.constant 0 : index
    %c0_40 = arith.constant 0 : index
    %36 = vector.load %arg6[%c0_39, %c0_40] : memref<128x128xf32, #tpu.memory_space<vmem>>, vector<128x128xf32>
    %cst_41 = arith.constant dense<0.000000e+00> : vector<16x128xf32>
    %37 = tpu.matmul %35, %36, %cst_41 {dimension_numbers = #tpu.dot_dimension_numbers<[1], [0], [0], [1], [0, 0, 1, 1], [], []>} : vector<16x128xf32>, vector<128x128xf32>, vector<16x128xf32> -> vector<16x128xf32>
    %c0_42 = arith.constant 0 : index
    %c0_43 = arith.constant 0 : index
    %38 = vector.load %arg7[%c0_42, %c0_43] : memref<1x128xf32, #tpu.memory_space<vmem>>, vector<1x128xf32>
    %39 = vector.broadcast %38 : vector<1x128xf32> to vector<16x128xf32>
    %40 = arith.addf %37, %39 : vector<16x128xf32>
    %41 = arith.addf %34, %40 : vector<16x128xf32>
    %cst_44 = arith.constant 0.000000e+00 : f32
    %42 = vector.broadcast %cst_44 : f32 to vector<16x128xf32>
    %43 = arith.maximumf %41, %42 : vector<16x128xf32>
    %c16_45 = arith.constant 16 : index
    %c0_46 = arith.constant 0 : index
    %44 = vector.load %arg19[%c16_45, %c0_46] : memref<32x128xf32, #tpu.memory_space<vmem>>, vector<16x128xf32>
    tpu.vector_store %arg19[%c16_45, %c0_46], %43 {strides = array<i32>} : memref<32x128xf32, #tpu.memory_space<vmem>>, vector<16x128xf32>,
    %c14 = arith.constant 14 : index
    %c0_47 = arith.constant 0 : index
    %45 = vector.load %arg19[%c14, %c0_47] : memref<32x128xf32, #tpu.memory_space<vmem>>, vector<16x128xf32>
    %c0_48 = arith.constant 0 : index
    %c0_49 = arith.constant 0 : index
    %c0_50 = arith.constant 0 : index
    %46 = vector.load %arg8[%c0_48, %c0_49, %c0_50] : memref<2x128x128xf32, #tpu.memory_space<vmem>>, vector<1x128x128xf32>
    %47 = vector.shape_cast %46 : vector<1x128x128xf32> to vector<128x128xf32>
    %cst_51 = arith.constant dense<0.000000e+00> : vector<16x128xf32>
    %48 = tpu.matmul %45, %47, %cst_51 {dimension_numbers = #tpu.dot_dimension_numbers<[1], [0], [0], [1], [0, 0, 1, 1], [], []>} : vector<16x128xf32>, vector<128x128xf32>, vector<16x128xf32> -> vector<16x128xf32>
    %c16_52 = arith.constant 16 : index
    %c0_53 = arith.constant 0 : index
    %49 = vector.load %arg19[%c16_52, %c0_53] : memref<32x128xf32, #tpu.memory_space<vmem>>, vector<16x128xf32>
    %c1_54 = arith.constant 1 : index
    %c0_55 = arith.constant 0 : index
    %c0_56 = arith.constant 0 : index
    %50 = vector.load %arg8[%c1_54, %c0_55, %c0_56] : memref<2x128x128xf32, #tpu.memory_space<vmem>>, vector<1x128x128xf32>
    %51 = vector.shape_cast %50 : vector<1x128x128xf32> to vector<128x128xf32>
    %cst_57 = arith.constant dense<0.000000e+00> : vector<16x128xf32>
    %52 = tpu.matmul %49, %51, %cst_57 {dimension_numbers = #tpu.dot_dimension_numbers<[1], [0], [0], [1], [0, 0, 1, 1], [], []>} : vector<16x128xf32>, vector<128x128xf32>, vector<16x128xf32> -> vector<16x128xf32>
    %53 = arith.addf %48, %52 : vector<16x128xf32>
    %c0_58 = arith.constant 0 : index
    %c0_59 = arith.constant 0 : index
    %54 = vector.load %arg9[%c0_58, %c0_59] : memref<1x128xf32, #tpu.memory_space<vmem>>, vector<1x128xf32>
    %55 = vector.broadcast %54 : vector<1x128xf32> to vector<16x128xf32>
    %56 = arith.addf %53, %55 : vector<16x128xf32>
    %cst_60 = arith.constant 0.000000e+00 : f32
    %57 = vector.broadcast %cst_60 : f32 to vector<16x128xf32>
    %58 = arith.maximumf %56, %57 : vector<16x128xf32>
    %c16_61 = arith.constant 16 : index
    %c0_62 = arith.constant 0 : index
    %59 = vector.load %arg20[%c16_61, %c0_62] : memref<32x128xf32, #tpu.memory_space<vmem>>, vector<16x128xf32>
    tpu.vector_store %arg20[%c16_61, %c0_62], %58 {strides = array<i32>} : memref<32x128xf32, #tpu.memory_space<vmem>>, vector<16x128xf32>,
    %c14_63 = arith.constant 14 : index
    %c0_64 = arith.constant 0 : index
    %60 = vector.load %arg20[%c14_63, %c0_64] : memref<32x128xf32, #tpu.memory_space<vmem>>, vector<16x128xf32>
    %c0_65 = arith.constant 0 : index
    %c0_66 = arith.constant 0 : index
    %c0_67 = arith.constant 0 : index
    %61 = vector.load %arg10[%c0_65, %c0_66, %c0_67] : memref<2x128x128xf32, #tpu.memory_space<vmem>>, vector<1x128x128xf32>
    %62 = vector.shape_cast %61 : vector<1x128x128xf32> to vector<128x128xf32>
    %cst_68 = arith.constant dense<0.000000e+00> : vector<16x128xf32>
    %63 = tpu.matmul %60, %62, %cst_68 {dimension_numbers = #tpu.dot_dimension_numbers<[1], [0], [0], [1], [0, 0, 1, 1], [], []>} : vector<16x128xf32>, vector<128x128xf32>, vector<16x128xf32> -> vector<16x128xf32>
    %c16_69 = arith.constant 16 : index
    %c0_70 = arith.constant 0 : index
    %64 = vector.load %arg20[%c16_69, %c0_70] : memref<32x128xf32, #tpu.memory_space<vmem>>, vector<16x128xf32>
    %c1_71 = arith.constant 1 : index
    %c0_72 = arith.constant 0 : index
    %c0_73 = arith.constant 0 : index
    %65 = vector.load %arg10[%c1_71, %c0_72, %c0_73] : memref<2x128x128xf32, #tpu.memory_space<vmem>>, vector<1x128x128xf32>
    %66 = vector.shape_cast %65 : vector<1x128x128xf32> to vector<128x128xf32>
    %cst_74 = arith.constant dense<0.000000e+00> : vector<16x128xf32>
    %67 = tpu.matmul %64, %66, %cst_74 {dimension_numbers = #tpu.dot_dimension_numbers<[1], [0], [0], [1], [0, 0, 1, 1], [], []>} : vector<16x128xf32>, vector<128x128xf32>, vector<16x128xf32> -> vector<16x128xf32>
    %68 = arith.addf %63, %67 : vector<16x128xf32>
    %c0_75 = arith.constant 0 : index
    %c0_76 = arith.constant 0 : index
    %69 = vector.load %arg11[%c0_75, %c0_76] : memref<1x128xf32, #tpu.memory_space<vmem>>, vector<1x128xf32>
    %70 = vector.broadcast %69 : vector<1x128xf32> to vector<16x128xf32>
    %71 = arith.addf %68, %70 : vector<16x128xf32>
    %cst_77 = arith.constant 0.000000e+00 : f32
    %72 = vector.broadcast %cst_77 : f32 to vector<16x128xf32>
    %73 = arith.maximumf %71, %72 : vector<16x128xf32>
    %c16_78 = arith.constant 16 : index
    %c0_79 = arith.constant 0 : index
    %74 = vector.load %arg19[%c16_78, %c0_79] : memref<32x128xf32, #tpu.memory_space<vmem>>, vector<16x128xf32>
    %75 = arith.addf %73, %74 : vector<16x128xf32>
    %cst_80 = arith.constant 0.000000e+00 : f32
    %76 = vector.broadcast %cst_80 : f32 to vector<16x128xf32>
    %77 = arith.maximumf %75, %76 : vector<16x128xf32>
    %c16_81 = arith.constant 16 : index
    %c0_82 = arith.constant 0 : index
    %78 = vector.load %arg19[%c16_81, %c0_82] : memref<32x128xf32, #tpu.memory_space<vmem>>, vector<16x128xf32>
    tpu.vector_store %arg19[%c16_81, %c0_82], %77 {strides = array<i32>} : memref<32x128xf32, #tpu.memory_space<vmem>>, vector<16x128xf32>,
    %c12 = arith.constant 12 : index
    %c0_83 = arith.constant 0 : index
    %79 = vector.load %arg19[%c12, %c0_83] : memref<32x128xf32, #tpu.memory_space<vmem>>, vector<16x128xf32>
    %c0_84 = arith.constant 0 : index
    %c0_85 = arith.constant 0 : index
    %c0_86 = arith.constant 0 : index
    %80 = vector.load %arg12[%c0_84, %c0_85, %c0_86] : memref<2x128x128xf32, #tpu.memory_space<vmem>>, vector<1x128x128xf32>
    %81 = vector.shape_cast %80 : vector<1x128x128xf32> to vector<128x128xf32>
    %cst_87 = arith.constant dense<0.000000e+00> : vector<16x128xf32>
    %82 = tpu.matmul %79, %81, %cst_87 {dimension_numbers = #tpu.dot_dimension_numbers<[1], [0], [0], [1], [0, 0, 1, 1], [], []>} : vector<16x128xf32>, vector<128x128xf32>, vector<16x128xf32> -> vector<16x128xf32>
    %c16_88 = arith.constant 16 : index
    %c0_89 = arith.constant 0 : index
    %83 = vector.load %arg19[%c16_88, %c0_89] : memref<32x128xf32, #tpu.memory_space<vmem>>, vector<16x128xf32>
    %c1_90 = arith.constant 1 : index
    %c0_91 = arith.constant 0 : index
    %c0_92 = arith.constant 0 : index
    %84 = vector.load %arg12[%c1_90, %c0_91, %c0_92] : memref<2x128x128xf32, #tpu.memory_space<vmem>>, vector<1x128x128xf32>
    %85 = vector.shape_cast %84 : vector<1x128x128xf32> to vector<128x128xf32>
    %cst_93 = arith.constant dense<0.000000e+00> : vector<16x128xf32>
    %86 = tpu.matmul %83, %85, %cst_93 {dimension_numbers = #tpu.dot_dimension_numbers<[1], [0], [0], [1], [0, 0, 1, 1], [], []>} : vector<16x128xf32>, vector<128x128xf32>, vector<16x128xf32> -> vector<16x128xf32>
    %87 = arith.addf %82, %86 : vector<16x128xf32>
    %c0_94 = arith.constant 0 : index
    %c0_95 = arith.constant 0 : index
    %88 = vector.load %arg13[%c0_94, %c0_95] : memref<1x128xf32, #tpu.memory_space<vmem>>, vector<1x128xf32>
    %89 = vector.broadcast %88 : vector<1x128xf32> to vector<16x128xf32>
    %90 = arith.addf %87, %89 : vector<16x128xf32>
    %cst_96 = arith.constant 0.000000e+00 : f32
    %91 = vector.broadcast %cst_96 : f32 to vector<16x128xf32>
    %92 = arith.maximumf %90, %91 : vector<16x128xf32>
    %c16_97 = arith.constant 16 : index
    %c0_98 = arith.constant 0 : index
    %93 = vector.load %arg20[%c16_97, %c0_98] : memref<32x128xf32, #tpu.memory_space<vmem>>, vector<16x128xf32>
    tpu.vector_store %arg20[%c16_97, %c0_98], %92 {strides = array<i32>} : memref<32x128xf32, #tpu.memory_space<vmem>>, vector<16x128xf32>,
    %c12_99 = arith.constant 12 : index
    %c0_100 = arith.constant 0 : index
    %94 = vector.load %arg20[%c12_99, %c0_100] : memref<32x128xf32, #tpu.memory_space<vmem>>, vector<16x128xf32>
    %c0_101 = arith.constant 0 : index
    %c0_102 = arith.constant 0 : index
    %c0_103 = arith.constant 0 : index
    %95 = vector.load %arg14[%c0_101, %c0_102, %c0_103] : memref<2x128x128xf32, #tpu.memory_space<vmem>>, vector<1x128x128xf32>
    %96 = vector.shape_cast %95 : vector<1x128x128xf32> to vector<128x128xf32>
    %cst_104 = arith.constant dense<0.000000e+00> : vector<16x128xf32>
    %97 = tpu.matmul %94, %96, %cst_104 {dimension_numbers = #tpu.dot_dimension_numbers<[1], [0], [0], [1], [0, 0, 1, 1], [], []>} : vector<16x128xf32>, vector<128x128xf32>, vector<16x128xf32> -> vector<16x128xf32>
    %c16_105 = arith.constant 16 : index
    %c0_106 = arith.constant 0 : index
    %98 = vector.load %arg20[%c16_105, %c0_106] : memref<32x128xf32, #tpu.memory_space<vmem>>, vector<16x128xf32>
    %c1_107 = arith.constant 1 : index
    %c0_108 = arith.constant 0 : index
    %c0_109 = arith.constant 0 : index
    %99 = vector.load %arg14[%c1_107, %c0_108, %c0_109] : memref<2x128x128xf32, #tpu.memory_space<vmem>>, vector<1x128x128xf32>
    %100 = vector.shape_cast %99 : vector<1x128x128xf32> to vector<128x128xf32>
    %cst_110 = arith.constant dense<0.000000e+00> : vector<16x128xf32>
    %101 = tpu.matmul %98, %100, %cst_110 {dimension_numbers = #tpu.dot_dimension_numbers<[1], [0], [0], [1], [0, 0, 1, 1], [], []>} : vector<16x128xf32>, vector<128x128xf32>, vector<16x128xf32> -> vector<16x128xf32>
    %102 = arith.addf %97, %101 : vector<16x128xf32>
    %c0_111 = arith.constant 0 : index
    %c0_112 = arith.constant 0 : index
    %103 = vector.load %arg15[%c0_111, %c0_112] : memref<1x128xf32, #tpu.memory_space<vmem>>, vector<1x128xf32>
    %104 = vector.broadcast %103 : vector<1x128xf32> to vector<16x128xf32>
    %105 = arith.addf %102, %104 : vector<16x128xf32>
    %cst_113 = arith.constant 0.000000e+00 : f32
    %106 = vector.broadcast %cst_113 : f32 to vector<16x128xf32>
    %107 = arith.maximumf %105, %106 : vector<16x128xf32>
    %c16_114 = arith.constant 16 : index
    %c0_115 = arith.constant 0 : index
    %108 = vector.load %arg19[%c16_114, %c0_115] : memref<32x128xf32, #tpu.memory_space<vmem>>, vector<16x128xf32>
    %c0_116 = arith.constant 0 : index
    %c0_117 = arith.constant 0 : index
    %109 = vector.load %arg16[%c0_116, %c0_117] : memref<128x128xf32, #tpu.memory_space<vmem>>, vector<128x128xf32>
    %cst_118 = arith.constant dense<0.000000e+00> : vector<16x128xf32>
    %110 = tpu.matmul %108, %109, %cst_118 {dimension_numbers = #tpu.dot_dimension_numbers<[1], [0], [0], [1], [0, 0, 1, 1], [], []>} : vector<16x128xf32>, vector<128x128xf32>, vector<16x128xf32> -> vector<16x128xf32>
    %c0_119 = arith.constant 0 : index
    %c0_120 = arith.constant 0 : index
    %111 = vector.load %arg17[%c0_119, %c0_120] : memref<1x128xf32, #tpu.memory_space<vmem>>, vector<1x128xf32>
    %112 = vector.broadcast %111 : vector<1x128xf32> to vector<16x128xf32>
    %113 = arith.addf %110, %112 : vector<16x128xf32>
    %114 = arith.addf %107, %113 : vector<16x128xf32>
    %cst_121 = arith.constant 0.000000e+00 : f32
    %115 = vector.broadcast %cst_121 : f32 to vector<16x128xf32>
    %116 = arith.maximumf %114, %115 : vector<16x128xf32>
    %c0_122 = arith.constant 0 : index
    %c0_123 = arith.constant 0 : index
    %c0_124 = arith.constant 0 : index
    %117 = vector.load %arg18[%c0_122, %c0_123, %c0_124] : memref<1x16x128xf32, #tpu.memory_space<vmem>>, vector<1x16x128xf32>
    %118 = vector.shape_cast %117 : vector<1x16x128xf32> to vector<16x128xf32>
    %119 = vector.shape_cast %116 : vector<16x128xf32> to vector<1x16x128xf32>
    tpu.vector_store %arg18[%c0_122, %c0_123, %c0_124], %119 {strides = array<i32>} : memref<1x16x128xf32, #tpu.memory_space<vmem>>, vector<1x16x128xf32>,
    return
  }
  func.func @transform_0(%arg0: i32) -> (i32, i32, i32) {
    %c0_i32 = arith.constant 0 : i32
    %c0_i32_0 = arith.constant 0 : i32
    %c0_i32_1 = arith.constant 0 : i32
    return %arg0, %c0_i32, %c0_i32_0 : i32, i32, i32
  }
  func.func @transform_1(%arg0: i32) -> (i32, i32, i32) {
    %c0_i32 = arith.constant 0 : i32
    %c0_i32_0 = arith.constant 0 : i32
    %c0_i32_1 = arith.constant 0 : i32
    %c0_i32_2 = arith.constant 0 : i32
    return %c0_i32, %c0_i32_0, %c0_i32_1 : i32, i32, i32
  }
  func.func @transform_2(%arg0: i32) -> (i32, i32) {
    %c0_i32 = arith.constant 0 : i32
    %c0_i32_0 = arith.constant 0 : i32
    %c0_i32_1 = arith.constant 0 : i32
    return %c0_i32, %c0_i32_0 : i32, i32
  }
  func.func @transform_3(%arg0: i32) -> (i32, i32, i32) {
    %c0_i32 = arith.constant 0 : i32
    %c0_i32_0 = arith.constant 0 : i32
    %c0_i32_1 = arith.constant 0 : i32
    %c0_i32_2 = arith.constant 0 : i32
    return %c0_i32, %c0_i32_0, %c0_i32_1 : i32, i32, i32
  }
  func.func @transform_4(%arg0: i32) -> (i32, i32) {
    %c0_i32 = arith.constant 0 : i32
    %c0_i32_0 = arith.constant 0 : i32
    %c0_i32_1 = arith.constant 0 : i32
    return %c0_i32, %c0_i32_0 : i32, i32
  }
  func.func @transform_5(%arg0: i32) -> (i32, i32) {
    %c0_i32 = arith.constant 0 : i32
    %c0_i32_0 = arith.constant 0 : i32
    %c0_i32_1 = arith.constant 0 : i32
    return %c0_i32, %c0_i32_0 : i32, i32
  }
  func.func @transform_6(%arg0: i32) -> (i32, i32) {
    %c0_i32 = arith.constant 0 : i32
    %c0_i32_0 = arith.constant 0 : i32
    %c0_i32_1 = arith.constant 0 : i32
    return %c0_i32, %c0_i32_0 : i32, i32
  }
  func.func @transform_7(%arg0: i32) -> (i32, i32, i32) {
    %c0_i32 = arith.constant 0 : i32
    %c0_i32_0 = arith.constant 0 : i32
    %c0_i32_1 = arith.constant 0 : i32
    %c0_i32_2 = arith.constant 0 : i32
    return %c0_i32, %c0_i32_0, %c0_i32_1 : i32, i32, i32
  }
  func.func @transform_8(%arg0: i32) -> (i32, i32) {
    %c0_i32 = arith.constant 0 : i32
    %c0_i32_0 = arith.constant 0 : i32
    %c0_i32_1 = arith.constant 0 : i32
    return %c0_i32, %c0_i32_0 : i32, i32
  }
  func.func @transform_9(%arg0: i32) -> (i32, i32, i32) {
    %c0_i32 = arith.constant 0 : i32
    %c0_i32_0 = arith.constant 0 : i32
    %c0_i32_1 = arith.constant 0 : i32
    %c0_i32_2 = arith.constant 0 : i32
    return %c0_i32, %c0_i32_0, %c0_i32_1 : i32, i32, i32
  }
  func.func @transform_10(%arg0: i32) -> (i32, i32) {
    %c0_i32 = arith.constant 0 : i32
    %c0_i32_0 = arith.constant 0 : i32
    %c0_i32_1 = arith.constant 0 : i32
    return %c0_i32, %c0_i32_0 : i32, i32
  }
  func.func @transform_11(%arg0: i32) -> (i32, i32, i32) {
    %c0_i32 = arith.constant 0 : i32
    %c0_i32_0 = arith.constant 0 : i32
    %c0_i32_1 = arith.constant 0 : i32
    %c0_i32_2 = arith.constant 0 : i32
    return %c0_i32, %c0_i32_0, %c0_i32_1 : i32, i32, i32
  }
  func.func @transform_12(%arg0: i32) -> (i32, i32) {
    %c0_i32 = arith.constant 0 : i32
    %c0_i32_0 = arith.constant 0 : i32
    %c0_i32_1 = arith.constant 0 : i32
    return %c0_i32, %c0_i32_0 : i32, i32
  }
  func.func @transform_13(%arg0: i32) -> (i32, i32, i32) {
    %c0_i32 = arith.constant 0 : i32
    %c0_i32_0 = arith.constant 0 : i32
    %c0_i32_1 = arith.constant 0 : i32
    %c0_i32_2 = arith.constant 0 : i32
    return %c0_i32, %c0_i32_0, %c0_i32_1 : i32, i32, i32
  }
  func.func @transform_14(%arg0: i32) -> (i32, i32) {
    %c0_i32 = arith.constant 0 : i32
    %c0_i32_0 = arith.constant 0 : i32
    %c0_i32_1 = arith.constant 0 : i32
    return %c0_i32, %c0_i32_0 : i32, i32
  }
  func.func @transform_15(%arg0: i32) -> (i32, i32) {
    %c0_i32 = arith.constant 0 : i32
    %c0_i32_0 = arith.constant 0 : i32
    %c0_i32_1 = arith.constant 0 : i32
    return %c0_i32, %c0_i32_0 : i32, i32
  }
  func.func @transform_16(%arg0: i32) -> (i32, i32) {
    %c0_i32 = arith.constant 0 : i32
    %c0_i32_0 = arith.constant 0 : i32
    %c0_i32_1 = arith.constant 0 : i32
    return %c0_i32, %c0_i32_0 : i32, i32
  }
  func.func @transform_17(%arg0: i32) -> (i32, i32, i32) {
    %c0_i32 = arith.constant 0 : i32
    %c0_i32_0 = arith.constant 0 : i32
    %c0_i32_1 = arith.constant 0 : i32
    return %arg0, %c0_i32, %c0_i32_0 : i32, i32, i32
  }
}

</mosaic_0001>

<llo_original>
// kernel: tpu_custom_call.1
$region0: #{tpu_custom_call.1}
  #allocation0 [shape = 'u32[]', space=smem, size = 0x4, offset = 0x4, fixed_abs, tag = 'smem constant byte address 0x4 - core index']
  #allocation1 [shape = 'u32[144,128]{1,0:T(1,128)}', space=vmem, size = 0x12000, scoped, tag = 'internal scratch']
  #allocation2 [shape = 'f32[32,128]{1,0:T(8,128)}', space=vmem, size = 0x4000, scoped, tag = 'scratch operand']
  #allocation3 [shape = 'f32[32,128]{1,0:T(8,128)}', space=vmem, size = 0x4000, scoped, tag = 'scratch operand']
  %s0 = inlined_call_operand.hbm [shape: f32[2,16,128], index: 0, kind: input, shape index: {}]
  %s1 = inlined_call_operand.hbm [shape: f32[2,128,128], index: 1, kind: input, shape index: {}]
  %s2 = inlined_call_operand.vmem [shape: f32[1,128], index: 2, kind: input, shape index: {}]
  %s3 = inlined_call_operand.hbm [shape: f32[2,128,128], index: 3, kind: input, shape index: {}]
  %s4 = inlined_call_operand.vmem [shape: f32[1,128], index: 4, kind: input, shape index: {}]
  %s5 = inlined_call_operand.hbm [shape: f32[128,128], index: 5, kind: input, shape index: {}]
  %s6 = inlined_call_operand.vmem [shape: f32[1,128], index: 6, kind: input, shape index: {}]
  %s7 = inlined_call_operand.hbm [shape: f32[2,128,128], index: 7, kind: input, shape index: {}]
  %s8 = inlined_call_operand.vmem [shape: f32[1,128], index: 8, kind: input, shape index: {}]
  %s9 = inlined_call_operand.hbm [shape: f32[2,128,128], index: 9, kind: input, shape index: {}]
  %s10 = inlined_call_operand.vmem [shape: f32[1,128], index: 10, kind: input, shape index: {}]
  %s11 = inlined_call_operand.hbm [shape: f32[2,128,128], index: 11, kind: input, shape index: {}]
  %s12 = inlined_call_operand.vmem [shape: f32[1,128], index: 12, kind: input, shape index: {}]
  %s13 = inlined_call_operand.hbm [shape: f32[2,128,128], index: 13, kind: input, shape index: {}]
  %s14 = inlined_call_operand.vmem [shape: f32[1,128], index: 14, kind: input, shape index: {}]
  %s15 = inlined_call_operand.hbm [shape: f32[128,128], index: 15, kind: input, shape index: {}]
  %s16 = inlined_call_operand.vmem [shape: f32[1,128], index: 16, kind: input, shape index: {}]
  %s17 = inlined_call_operand.hbm [shape: f32[2,16,128], index: 17, kind: output, shape index: {}]
  %s18 = sld [smem:[#allocation0]]
  $region137: #{tpu_custom_call.1} parent=0
    _
  %s20 = ssub.s32 1, %s18
  %s21 = scalar_select 0, %s20, %s18
  $region1: #{tpu_custom_call.1} parent=0
    #allocation4 [shape = 'u8[16384]{0}', space=vmem, size = 0x4000, scoped, tag = 'input window, operand 0']
    #allocation5 [shape = 's32[2]{0}', space=sflag, size = 0x8, scoped, tag = 'scoped memory for tpu_custom_call.1']
    #allocation6 [shape = 's32[2]{0}', space=sflag, size = 0x8, scoped, tag = 'scoped memory for tpu_custom_call.1']
    #allocation7 [shape = 'u8[131072]{0}', space=vmem, size = 0x20000, scoped, tag = 'input window, operand 1, single buffered']
    #allocation8 [shape = 's32[1]{0}', space=sflag, size = 0x4, scoped, tag = 'scoped memory for tpu_custom_call.1']
    #allocation9 [shape = 'u8[131072]{0}', space=vmem, size = 0x20000, scoped, tag = 'input window, operand 3, single buffered']
    #allocation10 [shape = 'u8[65536]{0}', space=vmem, size = 0x10000, scoped, tag = 'input window, operand 5, single buffered']
    #allocation11 [shape = 's32[1]{0}', space=sflag, size = 0x4, scoped, tag = 'scoped memory for tpu_custom_call.1']
    #allocation12 [shape = 'u8[131072]{0}', space=vmem, size = 0x20000, scoped, tag = 'input window, operand 7, single buffered']
    #allocation13 [shape = 'u8[131072]{0}', space=vmem, size = 0x20000, scoped, tag = 'input window, operand 9, single buffered']
    #allocation14 [shape = 's32[1]{0}', space=sflag, size = 0x4, scoped, tag = 'scoped memory for tpu_custom_call.1']
    #allocation15 [shape = 'u8[131072]{0}', space=vmem, size = 0x20000, scoped, tag = 'input window, operand 11, single buffered']
    #allocation16 [shape = 'u8[131072]{0}', space=vmem, size = 0x20000, scoped, tag = 'input window, operand 13, single buffered']
    #allocation17 [shape = 's32[1]{0}', space=sflag, size = 0x4, scoped, tag = 'scoped memory for tpu_custom_call.1']
    #allocation18 [shape = 'u8[65536]{0}', space=vmem, size = 0x10000, scoped, tag = 'input window, operand 15, single buffered']
    #allocation19 [shape = 'u8[16384]{0}', space=vmem, size = 0x4000, scoped, tag = 'output window, operand 0']
    %22 = vsyncpa [#allocation5], 0
    %s23 = scalar_lea.sflag [#allocation5], 1
    %24 = vsyncpa %s23, 0
    %25 = vsyncpa [#allocation8], 0
    %26 = vsyncpa [#allocation11], 0
    %27 = vsyncpa [#allocation14], 0
    %28 = vsyncpa [#allocation17], 0
    %29 = vsyncpa [#allocation6], 0
    %s30 = scalar_lea.sflag [#allocation6], 1
    %31 = vsyncpa %s30, 0
    loop: start=0, step=1, limit=4
    $region2: #{tpu_custom_call.1} parent=1 // loop_pre_header
      _
    $region3: #{tpu_custom_call.1} parent=1 // loop_header
      %s33 = sphi 0, %s37
      %p34 = scmp.ge.s32.totalorder %s33, 4
      %s43 = sphi 0, %s45
      %s46 = sphi 0, %s43
      %s47 = sphi 0, %s46
      %s63 = sphi 0, %s47
      %s67 = sphi 0, %s67
      %s69 = sphi 0, %s67
      %s70 = sphi 0, %s69
      %s84 = sphi 0, %s70
      %s88 = sphi 0, %s88
      %s90 = sphi 0, %s88
      %s91 = sphi 0, %s90
      %s105 = sphi 0, %s91
      %s109 = sphi 0, %s109
      %s111 = sphi 0, %s109
      %s112 = sphi 0, %s111
      %s126 = sphi 0, %s112
      %s130 = sphi 0, %s130
      %s132 = sphi 0, %s130
      %s133 = sphi 0, %s132
      %s147 = sphi 0, %s133
      %s151 = sphi 0, %s151
      %s153 = sphi 0, %s151
      %s154 = sphi 0, %s153
      %s168 = sphi 0, %s154
      %s172 = sphi 0, %s172
      %s174 = sphi 0, %s172
      %s175 = sphi 0, %s174
      %s189 = sphi 0, %s175
      %s193 = sphi 0, %s193
      %s195 = sphi 0, %s193
      %s196 = sphi 0, %s195
      %s210 = sphi 0, %s196
      %s214 = sphi 0, %s214
      %s216 = sphi 0, %s214
      %s217 = sphi 0, %s216
      %s231 = sphi 0, %s217
      %s235 = sphi 0, %s235
      %s237 = sphi 0, %s235
      %s238 = sphi 0, %s237
      %s252 = sphi 0, %s238
      %s256 = sphi 0, %s256
      %s258 = sphi 0, %s256
      %s259 = sphi 0, %s258
      %s273 = sphi 0, %s259
      %s277 = sphi 0, %s277
      %s279 = sphi 0, %s277
      %s280 = sphi 0, %s279
      %s294 = sphi 0, %s280
      %s298 = sphi 0, %s298
      %s300 = sphi 0, %s298
      %s301 = sphi 0, %s300
      %s315 = sphi 0, %s301
      %s319 = sphi 0, %s319
      %s321 = sphi 0, %s319
      %s322 = sphi 0, %s321
      %s336 = sphi 0, %s322
      %s340 = sphi 0, %s340
      %s342 = sphi 0, %s340
      %s343 = sphi 0, %s342
      %s357 = sphi 0, %s343
      %s361 = sphi 0, %s361
      %s363 = sphi 0, %s361
      %s364 = sphi 0, %s363
      %s378 = sphi 0, %s364
      %s382 = sphi 0, %s382
      %s384 = sphi 0, %s382
      %s385 = sphi 0, %s384
      %s399 = sphi 0, %s385
      %s405 = sphi 0, %s407
      %s408 = sphi 0, %s405
      %s409 = sphi 0, %s408
      %s425 = sphi 0, %s409
    $region4: #{tpu_custom_call.1} parent=1 // loop_header_branch
      %36 = sbr.rel (%p34) target = $region8
    $region5: #{tpu_custom_call.1} parent=1 // loop_body
      %s38 = ssub.s32 %s33, 1
      %s39 = ssub.s32 %s33, 2
      %s40 = sadd.s32 %s33, 1
      %s41 = ssub.s32 %s33, %s40
      %p42 = scmp.eq.s32.totalorder %s41, 0
      %s44 = sadd.s32 %s43, 1
      %s45 = scalar_select %p42, %s43, %s44
      %p48 = pneg %p42
      %p49 = scmp.eq.s32.totalorder %s33, 1
      %p50 = por %p48, %p49
      %p51 = scmp.ne.s32.totalorder %s43, %s46
      %p52 = scmp.eq.s32.totalorder %s33, 0
      %p53 = por %p51, %p52
      %p54 = scmp.ne.s32.totalorder %s43, %s46
      %p55 = scmp.eq.s32.totalorder %s38, 1
      %p56 = por %p54, %p55
      %p57 = scmp.ne.s32.totalorder %s46, %s47
      %p58 = scmp.eq.s32.totalorder %s38, 0
      %p59 = por %p57, %p58
      %p60 = scmp.ne.s32.totalorder %s46, %s47
      %p61 = scmp.eq.s32.totalorder %s39, 1
      %p62 = por %p60, %p61
      %p64 = scmp.ne.s32.totalorder %s47, %s63
      %p65 = scmp.eq.s32.totalorder %s39, 0
      %p66 = por %p64, %p65
      %s68 = sadd.s32 %s67, 1
      %p71 = scmp.eq.s32.totalorder %s33, 1
      %p72 = scmp.ne.s32.totalorder %s67, %s69
      %p73 = scmp.eq.s32.totalorder %s33, 0
      %p74 = por %p72, %p73
      %p75 = scmp.ne.s32.totalorder %s67, %s69
      %p76 = scmp.eq.s32.totalorder %s38, 1
      %p77 = por %p75, %p76
      %p78 = scmp.ne.s32.totalorder %s69, %s70
      %p79 = scmp.eq.s32.totalorder %s38, 0
      %p80 = por %p78, %p79
      %p81 = scmp.ne.s32.totalorder %s69, %s70
      %p82 = scmp.eq.s32.totalorder %s39, 1
      %p83 = por %p81, %p82
      %p85 = scmp.ne.s32.totalorder %s70, %s84
      %p86 = scmp.eq.s32.totalorder %s39, 0
      %p87 = por %p85, %p86
      %s89 = sadd.s32 %s88, 1
      %p92 = scmp.eq.s32.totalorder %s33, 1
      %p93 = scmp.ne.s32.totalorder %s88, %s90
      %p94 = scmp.eq.s32.totalorder %s33, 0
      %p95 = por %p93, %p94
      %p96 = scmp.ne.s32.totalorder %s88, %s90
      %p97 = scmp.eq.s32.totalorder %s38, 1
      %p98 = por %p96, %p97
      %p99 = scmp.ne.s32.totalorder %s90, %s91
      %p100 = scmp.eq.s32.totalorder %s38, 0
      %p101 = por %p99, %p100
      %p102 = scmp.ne.s32.totalorder %s90, %s91
      %p103 = scmp.eq.s32.totalorder %s39, 1
      %p104 = por %p102, %p103
      %p106 = scmp.ne.s32.totalorder %s91, %s105
      %p107 = scmp.eq.s32.totalorder %s39, 0
      %p108 = por %p106, %p107
      %s110 = sadd.s32 %s109, 1
      %p113 = scmp.eq.s32.totalorder %s33, 1
      %p114 = scmp.ne.s32.totalorder %s109, %s111
      %p115 = scmp.eq.s32.totalorder %s33, 0
      %p116 = por %p114, %p115
      %p117 = scmp.ne.s32.totalorder %s109, %s111
      %p118 = scmp.eq.s32.totalorder %s38, 1
      %p119 = por %p117, %p118
      %p120 = scmp.ne.s32.totalorder %s111, %s112
      %p121 = scmp.eq.s32.totalorder %s38, 0
      %p122 = por %p120, %p121
      %p123 = scmp.ne.s32.totalorder %s111, %s112
      %p124 = scmp.eq.s32.totalorder %s39, 1
      %p125 = por %p123, %p124
      %p127 = scmp.ne.s32.totalorder %s112, %s126
      %p128 = scmp.eq.s32.totalorder %s39, 0
      %p129 = por %p127, %p128
      %s131 = sadd.s32 %s130, 1
      %p134 = scmp.eq.s32.totalorder %s33, 1
      %p135 = scmp.ne.s32.totalorder %s130, %s132
      %p136 = scmp.eq.s32.totalorder %s33, 0
      %p137 = por %p135, %p136
      %p138 = scmp.ne.s32.totalorder %s130, %s132
      %p139 = scmp.eq.s32.totalorder %s38, 1
      %p140 = por %p138, %p139
      %p141 = scmp.ne.s32.totalorder %s132, %s133
      %p142 = scmp.eq.s32.totalorder %s38, 0
      %p143 = por %p141, %p142
      %p144 = scmp.ne.s32.totalorder %s132, %s133
      %p145 = scmp.eq.s32.totalorder %s39, 1
      %p146 = por %p144, %p145
      %p148 = scmp.ne.s32.totalorder %s133, %s147
      %p149 = scmp.eq.s32.totalorder %s39, 0
      %p150 = por %p148, %p149
      %s152 = sadd.s32 %s151, 1
      %p155 = scmp.eq.s32.totalorder %s33, 1
      %p156 = scmp.ne.s32.totalorder %s151, %s153
      %p157 = scmp.eq.s32.totalorder %s33, 0
      %p158 = por %p156, %p157
      %p159 = scmp.ne.s32.totalorder %s151, %s153
      %p160 = scmp.eq.s32.totalorder %s38, 1
      %p161 = por %p159, %p160
      %p162 = scmp.ne.s32.totalorder %s153, %s154
      %p163 = scmp.eq.s32.totalorder %s38, 0
      %p164 = por %p162, %p163
      %p165 = scmp.ne.s32.totalorder %s153, %s154
      %p166 = scmp.eq.s32.totalorder %s39, 1
      %p167 = por %p165, %p166
      %p169 = scmp.ne.s32.totalorder %s154, %s168
      %p170 = scmp.eq.s32.totalorder %s39, 0
      %p171 = por %p169, %p170
      %s173 = sadd.s32 %s172, 1
      %p176 = scmp.eq.s32.totalorder %s33, 1
      %p177 = scmp.ne.s32.totalorder %s172, %s174
      %p178 = scmp.eq.s32.totalorder %s33, 0
      %p179 = por %p177, %p178
      %p180 = scmp.ne.s32.totalorder %s172, %s174
      %p181 = scmp.eq.s32.totalorder %s38, 1
      %p182 = por %p180, %p181
      %p183 = scmp.ne.s32.totalorder %s174, %s175
      %p184 = scmp.eq.s32.totalorder %s38, 0
      %p185 = por %p183, %p184
      %p186 = scmp.ne.s32.totalorder %s174, %s175
      %p187 = scmp.eq.s32.totalorder %s39, 1
      %p188 = por %p186, %p187
      %p190 = scmp.ne.s32.totalorder %s175, %s189
      %p191 = scmp.eq.s32.totalorder %s39, 0
      %p192 = por %p190, %p191
      %s194 = sadd.s32 %s193, 1
      %p197 = scmp.eq.s32.totalorder %s33, 1
      %p198 = scmp.ne.s32.totalorder %s193, %s195
      %p199 = scmp.eq.s32.totalorder %s33, 0
      %p200 = por %p198, %p199
      %p201 = scmp.ne.s32.totalorder %s193, %s195
      %p202 = scmp.eq.s32.totalorder %s38, 1
      %p203 = por %p201, %p202
      %p204 = scmp.ne.s32.totalorder %s195, %s196
      %p205 = scmp.eq.s32.totalorder %s38, 0
      %p206 = por %p204, %p205
      %p207 = scmp.ne.s32.totalorder %s195, %s196
      %p208 = scmp.eq.s32.totalorder %s39, 1
      %p209 = por %p207, %p208
      %p211 = scmp.ne.s32.totalorder %s196, %s210
      %p212 = scmp.eq.s32.totalorder %s39, 0
      %p213 = por %p211, %p212
      %s215 = sadd.s32 %s214, 1
      %p218 = scmp.eq.s32.totalorder %s33, 1
      %p219 = scmp.ne.s32.totalorder %s214, %s216
      %p220 = scmp.eq.s32.totalorder %s33, 0
      %p221 = por %p219, %p220
      %p222 = scmp.ne.s32.totalorder %s214, %s216
      %p223 = scmp.eq.s32.totalorder %s38, 1
      %p224 = por %p222, %p223
      %p225 = scmp.ne.s32.totalorder %s216, %s217
      %p226 = scmp.eq.s32.totalorder %s38, 0
      %p227 = por %p225, %p226
      %p228 = scmp.ne.s32.totalorder %s216, %s217
      %p229 = scmp.eq.s32.totalorder %s39, 1
      %p230 = por %p228, %p229
      %p232 = scmp.ne.s32.totalorder %s217, %s231
      %p233 = scmp.eq.s32.totalorder %s39, 0
      %p234 = por %p232, %p233
      %s236 = sadd.s32 %s235, 1
      %p239 = scmp.eq.s32.totalorder %s33, 1
      %p240 = scmp.ne.s32.totalorder %s235, %s237
      %p241 = scmp.eq.s32.totalorder %s33, 0
      %p242 = por %p240, %p241
      %p243 = scmp.ne.s32.totalorder %s235, %s237
      %p244 = scmp.eq.s32.totalorder %s38, 1
      %p245 = por %p243, %p244
      %p246 = scmp.ne.s32.totalorder %s237, %s238
      %p247 = scmp.eq.s32.totalorder %s38, 0
      %p248 = por %p246, %p247
      %p249 = scmp.ne.s32.totalorder %s237, %s238
      %p250 = scmp.eq.s32.totalorder %s39, 1
      %p251 = por %p249, %p250
      %p253 = scmp.ne.s32.totalorder %s238, %s252
      %p254 = scmp.eq.s32.totalorder %s39, 0
      %p255 = por %p253, %p254
      %s257 = sadd.s32 %s256, 1
      %p260 = scmp.eq.s32.totalorder %s33, 1
      %p261 = scmp.ne.s32.totalorder %s256, %s258
      %p262 = scmp.eq.s32.totalorder %s33, 0
      %p263 = por %p261, %p262
      %p264 = scmp.ne.s32.totalorder %s256, %s258
      %p265 = scmp.eq.s32.totalorder %s38, 1
      %p266 = por %p264, %p265
      %p267 = scmp.ne.s32.totalorder %s258, %s259
      %p268 = scmp.eq.s32.totalorder %s38, 0
      %p269 = por %p267, %p268
      %p270 = scmp.ne.s32.totalorder %s258, %s259
      %p271 = scmp.eq.s32.totalorder %s39, 1
      %p272 = por %p270, %p271
      %p274 = scmp.ne.s32.totalorder %s259, %s273
      %p275 = scmp.eq.s32.totalorder %s39, 0
      %p276 = por %p274, %p275
      %s278 = sadd.s32 %s277, 1
      %p281 = scmp.eq.s32.totalorder %s33, 1
      %p282 = scmp.ne.s32.totalorder %s277, %s279
      %p283 = scmp.eq.s32.totalorder %s33, 0
      %p284 = por %p282, %p283
      %p285 = scmp.ne.s32.totalorder %s277, %s279
      %p286 = scmp.eq.s32.totalorder %s38, 1
      %p287 = por %p285, %p286
      %p288 = scmp.ne.s32.totalorder %s279, %s280
      %p289 = scmp.eq.s32.totalorder %s38, 0
      %p290 = por %p288, %p289
      %p291 = scmp.ne.s32.totalorder %s279, %s280
      %p292 = scmp.eq.s32.totalorder %s39, 1
      %p293 = por %p291, %p292
      %p295 = scmp.ne.s32.totalorder %s280, %s294
      %p296 = scmp.eq.s32.totalorder %s39, 0
      %p297 = por %p295, %p296
      %s299 = sadd.s32 %s298, 1
      %p302 = scmp.eq.s32.totalorder %s33, 1
      %p303 = scmp.ne.s32.totalorder %s298, %s300
      %p304 = scmp.eq.s32.totalorder %s33, 0
      %p305 = por %p303, %p304
      %p306 = scmp.ne.s32.totalorder %s298, %s300
      %p307 = scmp.eq.s32.totalorder %s38, 1
      %p308 = por %p306, %p307
      %p309 = scmp.ne.s32.totalorder %s300, %s301
      %p310 = scmp.eq.s32.totalorder %s38, 0
      %p311 = por %p309, %p310
      %p312 = scmp.ne.s32.totalorder %s300, %s301
      %p313 = scmp.eq.s32.totalorder %s39, 1
      %p314 = por %p312, %p313
      %p316 = scmp.ne.s32.totalorder %s301, %s315
      %p317 = scmp.eq.s32.totalorder %s39, 0
      %p318 = por %p316, %p317
      %s320 = sadd.s32 %s319, 1
      %p323 = scmp.eq.s32.totalorder %s33, 1
      %p324 = scmp.ne.s32.totalorder %s319, %s321
      %p325 = scmp.eq.s32.totalorder %s33, 0
      %p326 = por %p324, %p325
      %p327 = scmp.ne.s32.totalorder %s319, %s321
      %p328 = scmp.eq.s32.totalorder %s38, 1
      %p329 = por %p327, %p328
      %p330 = scmp.ne.s32.totalorder %s321, %s322
      %p331 = scmp.eq.s32.totalorder %s38, 0
      %p332 = por %p330, %p331
      %p333 = scmp.ne.s32.totalorder %s321, %s322
      %p334 = scmp.eq.s32.totalorder %s39, 1
      %p335 = por %p333, %p334
      %p337 = scmp.ne.s32.totalorder %s322, %s336
      %p338 = scmp.eq.s32.totalorder %s39, 0
      %p339 = por %p337, %p338
      %s341 = sadd.s32 %s340, 1
      %p344 = scmp.eq.s32.totalorder %s33, 1
      %p345 = scmp.ne.s32.totalorder %s340, %s342
      %p346 = scmp.eq.s32.totalorder %s33, 0
      %p347 = por %p345, %p346
      %p348 = scmp.ne.s32.totalorder %s340, %s342
      %p349 = scmp.eq.s32.totalorder %s38, 1
      %p350 = por %p348, %p349
      %p351 = scmp.ne.s32.totalorder %s342, %s343
      %p352 = scmp.eq.s32.totalorder %s38, 0
      %p353 = por %p351, %p352
      %p354 = scmp.ne.s32.totalorder %s342, %s343
      %p355 = scmp.eq.s32.totalorder %s39, 1
      %p356 = por %p354, %p355
      %p358 = scmp.ne.s32.totalorder %s343, %s357
      %p359 = scmp.eq.s32.totalorder %s39, 0
      %p360 = por %p358, %p359
      %s362 = sadd.s32 %s361, 1
      %p365 = scmp.eq.s32.totalorder %s33, 1
      %p366 = scmp.ne.s32.totalorder %s361, %s363
      %p367 = scmp.eq.s32.totalorder %s33, 0
      %p368 = por %p366, %p367
      %p369 = scmp.ne.s32.totalorder %s361, %s363
      %p370 = scmp.eq.s32.totalorder %s38, 1
      %p371 = por %p369, %p370
      %p372 = scmp.ne.s32.totalorder %s363, %s364
      %p373 = scmp.eq.s32.totalorder %s38, 0
      %p374 = por %p372, %p373
      %p375 = scmp.ne.s32.totalorder %s363, %s364
      %p376 = scmp.eq.s32.totalorder %s39, 1
      %p377 = por %p375, %p376
      %p379 = scmp.ne.s32.totalorder %s364, %s378
      %p380 = scmp.eq.s32.totalorder %s39, 0
      %p381 = por %p379, %p380
      %s383 = sadd.s32 %s382, 1
      %p386 = scmp.eq.s32.totalorder %s33, 1
      %p387 = scmp.ne.s32.totalorder %s382, %s384
      %p388 = scmp.eq.s32.totalorder %s33, 0
      %p389 = por %p387, %p388
      %p390 = scmp.ne.s32.totalorder %s382, %s384
      %p391 = scmp.eq.s32.totalorder %s38, 1
      %p392 = por %p390, %p391
      %p393 = scmp.ne.s32.totalorder %s384, %s385
      %p394 = scmp.eq.s32.totalorder %s38, 0
      %p395 = por %p393, %p394
      %p396 = scmp.ne.s32.totalorder %s384, %s385
      %p397 = scmp.eq.s32.totalorder %s39, 1
      %p398 = por %p396, %p397
      %p400 = scmp.ne.s32.totalorder %s385, %s399
      %p401 = scmp.eq.s32.totalorder %s39, 0
      %p402 = por %p400, %p401
      %s403 = ssub.s32 %s33, %s40
      %p404 = scmp.eq.s32.totalorder %s403, 0
      %s406 = sadd.s32 %s405, 1
      %s407 = scalar_select %p404, %s405, %s406
      %p410 = pneg %p404
      %p411 = scmp.eq.s32.totalorder %s33, 1
      %p412 = por %p410, %p411
      %p413 = scmp.ne.s32.totalorder %s405, %s408
      %p414 = scmp.eq.s32.totalorder %s33, 0
      %p415 = por %p413, %p414
      %p416 = scmp.ne.s32.totalorder %s405, %s408
      %p417 = scmp.eq.s32.totalorder %s38, 1
      %p418 = por %p416, %p417
      %p419 = scmp.ne.s32.totalorder %s408, %s409
      %p420 = scmp.eq.s32.totalorder %s38, 0
      %p421 = por %p419, %p420
      %p422 = scmp.ne.s32.totalorder %s408, %s409
      %p423 = scmp.eq.s32.totalorder %s39, 1
      %p424 = por %p422, %p423
      %p426 = scmp.ne.s32.totalorder %s409, %s425
      %p427 = scmp.eq.s32.totalorder %s39, 0
      %p428 = por %p426, %p427
      %p429 = scmp.le.s32.totalorder 1, %s33
      %p430 = scmp.lt.s32.totalorder %s33, 3
      %p431 = pnand %p429, %p430
      %p432 = pneg %p431
      // Predicated region
      $region9: #{tpu_custom_call.1} parent=5 // pred_check
        _
      $region10: #{tpu_custom_call.1} parent=5 // pred_check_branch
        %434 = sbr.rel (%p431) target = $region12
      $region11: #{tpu_custom_call.1} parent=5 // pred_region
        %s435 = ssub.s32 %s33, 1
        // Predicated region
        $region13: #{tpu_custom_call.1} parent=11 // pred_check
          %p436 = pneg %p80
        $region14: #{tpu_custom_call.1} parent=11 // pred_check_branch
          %438 = sbr.rel (%p436) target = $region16
        $region15: #{tpu_custom_call.1} parent=11 // pred_region
          %s440 = ssub.s32 4096, 4096
          %441 = vsyncadd [#allocation8], %s440
          %s442 = sshll.u32 [#allocation7], 4
          %s443 = int_to_ptr.vmem [resolvable:$true] %s442
          %448 = dma.hbm_to_vmem [thread:$0]  %s1, 4096, %s443, [#allocation8], 128, 128, 8
        $region16: #{tpu_custom_call.1} parent=11 // pred_fallthru
          _
        // Predicated region
        $region17: #{tpu_custom_call.1} parent=11 // pred_check
          %p449 = pneg %p101
        $region18: #{tpu_custom_call.1} parent=11 // pred_check_branch
          %451 = sbr.rel (%p449) target = $region20
        $region19: #{tpu_custom_call.1} parent=11 // pred_region
          _
        $region20: #{tpu_custom_call.1} parent=11 // pred_fallthru
          _
        // Predicated region
        $region21: #{tpu_custom_call.1} parent=11 // pred_check
          %p452 = pneg %p122
        $region22: #{tpu_custom_call.1} parent=11 // pred_check_branch
          %454 = sbr.rel (%p452) target = $region24
        $region23: #{tpu_custom_call.1} parent=11 // pred_region
          %s456 = ssub.s32 4096, 4096
          %457 = vsyncadd [#allocation8], %s456
          %s458 = sshll.u32 [#allocation9], 4
          %s459 = int_to_ptr.vmem [resolvable:$true] %s458
          %464 = dma.hbm_to_vmem [thread:$0]  %s3, 4096, %s459, [#allocation8], 128, 128, 8
        $region24: #{tpu_custom_call.1} parent=11 // pred_fallthru
          _
        // Predicated region
        $region25: #{tpu_custom_call.1} parent=11 // pred_check
          %p465 = pneg %p143
        $region26: #{tpu_custom_call.1} parent=11 // pred_check_branch
          %467 = sbr.rel (%p465) target = $region28
        $region27: #{tpu_custom_call.1} parent=11 // pred_region
          _
        $region28: #{tpu_custom_call.1} parent=11 // pred_fallthru
          _
        // Predicated region
        $region29: #{tpu_custom_call.1} parent=11 // pred_check
          %p468 = pneg %p164
        $region30: #{tpu_custom_call.1} parent=11 // pred_check_branch
          %470 = sbr.rel (%p468) target = $region32
        $region31: #{tpu_custom_call.1} parent=11 // pred_region
          %s472 = ssub.s32 2048, 2048
          %473 = vsyncadd [#allocation11], %s472
          %s474 = sshll.u32 [#allocation10], 4
          %s475 = int_to_ptr.vmem [resolvable:$true] %s474
          %480 = dma.hbm_to_vmem [thread:$0]  %s5, 2048, %s475, [#allocation11], 128, 128, 8
        $region32: #{tpu_custom_call.1} parent=11 // pred_fallthru
          _
        // Predicated region
        $region33: #{tpu_custom_call.1} parent=11 // pred_check
          %p481 = pneg %p185
        $region34: #{tpu_custom_call.1} parent=11 // pred_check_branch
          %483 = sbr.rel (%p481) target = $region36
        $region35: #{tpu_custom_call.1} parent=11 // pred_region
          _
        $region36: #{tpu_custom_call.1} parent=11 // pred_fallthru
          _
        // Predicated region
        $region37: #{tpu_custom_call.1} parent=11 // pred_check
          %p484 = pneg %p206
        $region38: #{tpu_custom_call.1} parent=11 // pred_check_branch
          %486 = sbr.rel (%p484) target = $region40
        $region39: #{tpu_custom_call.1} parent=11 // pred_region
          %s488 = ssub.s32 4096, 4096
          %489 = vsyncadd [#allocation11], %s488
          %s490 = sshll.u32 [#allocation12], 4
          %s491 = int_to_ptr.vmem [resolvable:$true] %s490
          %496 = dma.hbm_to_vmem [thread:$0]  %s7, 4096, %s491, [#allocation11], 128, 128, 8
        $region40: #{tpu_custom_call.1} parent=11 // pred_fallthru
          _
        // Predicated region
        $region41: #{tpu_custom_call.1} parent=11 // pred_check
          %p497 = pneg %p227
        $region42: #{tpu_custom_call.1} parent=11 // pred_check_branch
          %499 = sbr.rel (%p497) target = $region44
        $region43: #{tpu_custom_call.1} parent=11 // pred_region
          _
        $region44: #{tpu_custom_call.1} parent=11 // pred_fallthru
          _
        // Predicated region
        $region45: #{tpu_custom_call.1} parent=11 // pred_check
          %p500 = pneg %p248
        $region46: #{tpu_custom_call.1} parent=11 // pred_check_branch
          %502 = sbr.rel (%p500) target = $region48
        $region47: #{tpu_custom_call.1} parent=11 // pred_region
          %s504 = ssub.s32 4096, 4096
          %505 = vsyncadd [#allocation14], %s504
          %s506 = sshll.u32 [#allocation13], 4
          %s507 = int_to_ptr.vmem [resolvable:$true] %s506
          %512 = dma.hbm_to_vmem [thread:$0]  %s9, 4096, %s507, [#allocation14], 128, 128, 8
        $region48: #{tpu_custom_call.1} parent=11 // pred_fallthru
          _
        // Predicated region
        $region49: #{tpu_custom_call.1} parent=11 // pred_check
          %p513 = pneg %p269
        $region50: #{tpu_custom_call.1} parent=11 // pred_check_branch
          %515 = sbr.rel (%p513) target = $region52
        $region51: #{tpu_custom_call.1} parent=11 // pred_region
          _
        $region52: #{tpu_custom_call.1} parent=11 // pred_fallthru
          _
        // Predicated region
        $region53: #{tpu_custom_call.1} parent=11 // pred_check
          %p516 = pneg %p290
        $region54: #{tpu_custom_call.1} parent=11 // pred_check_branch
          %518 = sbr.rel (%p516) target = $region56
        $region55: #{tpu_custom_call.1} parent=11 // pred_region
          %s520 = ssub.s32 4096, 4096
          %521 = vsyncadd [#allocation14], %s520
          %s522 = sshll.u32 [#allocation15], 4
          %s523 = int_to_ptr.vmem [resolvable:$true] %s522
          %528 = dma.hbm_to_vmem [thread:$0]  %s11, 4096, %s523, [#allocation14], 128, 128, 8
        $region56: #{tpu_custom_call.1} parent=11 // pred_fallthru
          _
        // Predicated region
        $region57: #{tpu_custom_call.1} parent=11 // pred_check
          %p529 = pneg %p311
        $region58: #{tpu_custom_call.1} parent=11 // pred_check_branch
          %531 = sbr.rel (%p529) target = $region60
        $region59: #{tpu_custom_call.1} parent=11 // pred_region
          _
        $region60: #{tpu_custom_call.1} parent=11 // pred_fallthru
          _
        // Predicated region
        $region61: #{tpu_custom_call.1} parent=11 // pred_check
          %p532 = pneg %p332
        $region62: #{tpu_custom_call.1} parent=11 // pred_check_branch
          %534 = sbr.rel (%p532) target = $region64
        $region63: #{tpu_custom_call.1} parent=11 // pred_region
          %s536 = ssub.s32 4096, 4096
          %537 = vsyncadd [#allocation17], %s536
          %s538 = sshll.u32 [#allocation16], 4
          %s539 = int_to_ptr.vmem [resolvable:$true] %s538
          %544 = dma.hbm_to_vmem [thread:$0]  %s13, 4096, %s539, [#allocation17], 128, 128, 8
        $region64: #{tpu_custom_call.1} parent=11 // pred_fallthru
          _
        // Predicated region
        $region65: #{tpu_custom_call.1} parent=11 // pred_check
          %p545 = pneg %p353
        $region66: #{tpu_custom_call.1} parent=11 // pred_check_branch
          %547 = sbr.rel (%p545) target = $region68
        $region67: #{tpu_custom_call.1} parent=11 // pred_region
          _
        $region68: #{tpu_custom_call.1} parent=11 // pred_fallthru
          _
        // Predicated region
        $region69: #{tpu_custom_call.1} parent=11 // pred_check
          %p548 = pneg %p374
        $region70: #{tpu_custom_call.1} parent=11 // pred_check_branch
          %550 = sbr.rel (%p548) target = $region72
        $region71: #{tpu_custom_call.1} parent=11 // pred_region
          %s552 = ssub.s32 2048, 2048
          %553 = vsyncadd [#allocation17], %s552
          %s554 = sshll.u32 [#allocation18], 4
          %s555 = int_to_ptr.vmem [resolvable:$true] %s554
          %560 = dma.hbm_to_vmem [thread:$0]  %s15, 2048, %s555, [#allocation17], 128, 128, 8
        $region72: #{tpu_custom_call.1} parent=11 // pred_fallthru
          _
        // Predicated region
        $region73: #{tpu_custom_call.1} parent=11 // pred_check
          %p561 = pneg %p395
        $region74: #{tpu_custom_call.1} parent=11 // pred_check_branch
          %563 = sbr.rel (%p561) target = $region76
        $region75: #{tpu_custom_call.1} parent=11 // pred_region
          _
        $region76: #{tpu_custom_call.1} parent=11 // pred_fallthru
          _
      $region12: #{tpu_custom_call.1} parent=5 // pred_fallthru
        _
      %p564 = scmp.lt.s32.totalorder %s33, 2
      // Predicated region
      $region77: #{tpu_custom_call.1} parent=5 // pred_check
        %p565 = pneg %p564
      $region78: #{tpu_custom_call.1} parent=5 // pred_check_branch
        %567 = sbr.rel (%p565) target = $region80
      $region79: #{tpu_custom_call.1} parent=5 // pred_region
        // Predicated region
        $region81: #{tpu_custom_call.1} parent=79 // pred_check
          %p568 = pneg %p53
        $region82: #{tpu_custom_call.1} parent=79 // pred_check_branch
          %570 = sbr.rel (%p568) target = $region84
        $region83: #{tpu_custom_call.1} parent=79 // pred_region
          %s571 = sand.u32 %s43, 1
          %s572 = scalar_lea.sflag [#allocation5], %s571
          %s573 = sand.u32 %s43, 1
          %s574 = smul.addr %s573, 16
          %s575 = scalar_lea.vmem [#allocation4], %s574
          %s577 = ssub.s32 256, 256
          %578 = vsyncadd %s572, %s577
          %s579 = smul.addr %s33, 2
          %s580 = smul.addr %s579, 128
          %s581 = scalar_lea.hbm %s0, %s580
          %s582 = sshll.u32 %s575, 4
          %s583 = int_to_ptr.vmem [resolvable:$true] %s582
          %588 = dma.hbm_to_vmem [thread:$0]  %s581, 256, %s583, %s572, 128, 128, 8
        $region84: #{tpu_custom_call.1} parent=79 // pred_fallthru
          _
      $region80: #{tpu_custom_call.1} parent=5 // pred_fallthru
        _
      %p589 = scmp.le.s32.totalorder 1, %s33
      %p590 = scmp.lt.s32.totalorder %s33, 3
      %p591 = pnand %p589, %p590
      %p592 = pneg %p591
      // Predicated region
      $region85: #{tpu_custom_call.1} parent=5 // pred_check
        _
      $region86: #{tpu_custom_call.1} parent=5 // pred_check_branch
        %594 = sbr.rel (%p591) target = $region88
      $region87: #{tpu_custom_call.1} parent=5 // pred_region
        %s595 = ssub.s32 %s33, 1
        %s596 = sand.u32 %s46, 1
        %s597 = scalar_lea.sflag [#allocation5], %s596
        %s598 = sand.u32 %s46, 1
        %s599 = smul.addr %s598, 16
        %s600 = scalar_lea.vmem [#allocation4], %s599
        // Predicated region
        $region89: #{tpu_custom_call.1} parent=87 // pred_check
          %p601 = pneg %p59
        $region90: #{tpu_custom_call.1} parent=87 // pred_check_branch
          %603 = sbr.rel (%p601) target = $region92
        $region91: #{tpu_custom_call.1} parent=87 // pred_region
          %604 = dma.done %s597, 256
        $region92: #{tpu_custom_call.1} parent=87 // pred_fallthru
          _
        // Predicated region
        $region93: #{tpu_custom_call.1} parent=87 // pred_check
          %p605 = pneg %p80
        $region94: #{tpu_custom_call.1} parent=87 // pred_check_branch
          %607 = sbr.rel (%p605) target = $region96
        $region95: #{tpu_custom_call.1} parent=87 // pred_region
          %608 = dma.done [#allocation8], 4096
        $region96: #{tpu_custom_call.1} parent=87 // pred_fallthru
          _
        // Predicated region
        $region97: #{tpu_custom_call.1} parent=87 // pred_check
          %p609 = pneg %p122
        $region98: #{tpu_custom_call.1} parent=87 // pred_check_branch
          %611 = sbr.rel (%p609) target = $region100
        $region99: #{tpu_custom_call.1} parent=87 // pred_region
          %612 = dma.done [#allocation8], 4096
        $region100: #{tpu_custom_call.1} parent=87 // pred_fallthru
          _
        // Predicated region
        $region101: #{tpu_custom_call.1} parent=87 // pred_check
          %p613 = pneg %p164
        $region102: #{tpu_custom_call.1} parent=87 // pred_check_branch
          %615 = sbr.rel (%p613) target = $region104
        $region103: #{tpu_custom_call.1} parent=87 // pred_region
          %616 = dma.done [#allocation11], 2048
        $region104: #{tpu_custom_call.1} parent=87 // pred_fallthru
          _
        // Predicated region
        $region105: #{tpu_custom_call.1} parent=87 // pred_check
          %p617 = pneg %p206
        $region106: #{tpu_custom_call.1} parent=87 // pred_check_branch
          %619 = sbr.rel (%p617) target = $region108
        $region107: #{tpu_custom_call.1} parent=87 // pred_region
          %620 = dma.done [#allocation11], 4096
        $region108: #{tpu_custom_call.1} parent=87 // pred_fallthru
          _
        // Predicated region
        $region109: #{tpu_custom_call.1} parent=87 // pred_check
          %p621 = pneg %p248
        $region110: #{tpu_custom_call.1} parent=87 // pred_check_branch
          %623 = sbr.rel (%p621) target = $region112
        $region111: #{tpu_custom_call.1} parent=87 // pred_region
          %624 = dma.done [#allocation14], 4096
        $region112: #{tpu_custom_call.1} parent=87 // pred_fallthru
          _
        // Predicated region
        $region113: #{tpu_custom_call.1} parent=87 // pred_check
          %p625 = pneg %p290
        $region114: #{tpu_custom_call.1} parent=87 // pred_check_branch
          %627 = sbr.rel (%p625) target = $region116
        $region115: #{tpu_custom_call.1} parent=87 // pred_region
          %628 = dma.done [#allocation14], 4096
        $region116: #{tpu_custom_call.1} parent=87 // pred_fallthru
          _
        // Predicated region
        $region117: #{tpu_custom_call.1} parent=87 // pred_check
          %p629 = pneg %p332
        $region118: #{tpu_custom_call.1} parent=87 // pred_check_branch
          %631 = sbr.rel (%p629) target = $region120
        $region119: #{tpu_custom_call.1} parent=87 // pred_region
          %632 = dma.done [#allocation17], 4096
        $region120: #{tpu_custom_call.1} parent=87 // pred_fallthru
          _
        // Predicated region
        $region121: #{tpu_custom_call.1} parent=87 // pred_check
          %p633 = pneg %p374
        $region122: #{tpu_custom_call.1} parent=87 // pred_check_branch
          %635 = sbr.rel (%p633) target = $region124
        $region123: #{tpu_custom_call.1} parent=87 // pred_region
          %636 = dma.done [#allocation17], 2048
        $region124: #{tpu_custom_call.1} parent=87 // pred_fallthru
          _
        %s637 = sand.u32 %s46, 1
        %s638 = scalar_lea.sflag [#allocation5], %s637
        %s639 = sand.u32 %s46, 1
        %s640 = smul.addr %s639, 16
        %s641 = scalar_lea.vmem [#allocation4], %s640
        %p642 = pneg %p59
        %p643 = pneg %p56
        %p644 = pneg %p80
        %p645 = pneg %p77
        %p646 = pneg %p101
        %p647 = pneg %p98
        %p648 = pneg %p122
        %p649 = pneg %p119
        %p650 = pneg %p143
        %p651 = pneg %p140
        %p652 = pneg %p164
        %p653 = pneg %p161
        %p654 = pneg %p185
        %p655 = pneg %p182
        %p656 = pneg %p206
        %p657 = pneg %p203
        %p658 = pneg %p227
        %p659 = pneg %p224
        %p660 = pneg %p248
        %p661 = pneg %p245
        %p662 = pneg %p269
        %p663 = pneg %p266
        %p664 = pneg %p290
        %p665 = pneg %p287
        %p666 = pneg %p311
        %p667 = pneg %p308
        %p668 = pneg %p332
        %p669 = pneg %p329
        %p670 = pneg %p353
        %p671 = pneg %p350
        %p672 = pneg %p374
        %p673 = pneg %p371
        %p674 = pneg %p395
        %p675 = pneg %p392
        %p676 = pneg %p421
        %p677 = pneg %p418
        %s678 = sand.u32 %s408, 1
        %s679 = scalar_lea.sflag [#allocation6], %s678
        %s680 = sand.u32 %s408, 1
        %s681 = smul.addr %s680, 16
        %s682 = scalar_lea.vmem [#allocation19], %s681
        %683 = vst [vmem:[#allocation2] sm:$0xff] 0.0
        %684 = vst [vmem:[#allocation2 + $0x8] sm:$0xff] 0.0
        %685 = vst [vmem:[#allocation3] sm:$0xff] 0.0
        %686 = vst [vmem:[#allocation3 + $0x8] sm:$0xff] 0.0
        %v687 = vld [vmem:[%s600] sm:$0xff]
        %v688 = vld [vmem:[%s600 + $0x8] sm:$0xff]
        %689 = vst [vmem:[#allocation2 + $0x10] sm:$0xff] %v687
        %690 = vst [vmem:[#allocation2 + $0x18] sm:$0xff] %v688
        %v691 = vld [vmem:[#allocation2 + $0xf] sm:$0xff]
        %v692 = vld [vmem:[#allocation2 + $0x17] sm:$0xff]
        %v693 = vld [vmem:[#allocation7] sm:$0xff]
        %v694 = vld [vmem:[#allocation7 + $0x8] sm:$0xff]
        %v695 = vld [vmem:[#allocation7 + $0x10] sm:$0xff]
        %v696 = vld [vmem:[#allocation7 + $0x18] sm:$0xff]
        %v697 = vld [vmem:[#allocation7 + $0x20] sm:$0xff]
        %v698 = vld [vmem:[#allocation7 + $0x28] sm:$0xff]
        %v699 = vld [vmem:[#allocation7 + $0x30] sm:$0xff]
        %v700 = vld [vmem:[#allocation7 + $0x38] sm:$0xff]
        %v701 = vld [vmem:[#allocation7 + $0x40] sm:$0xff]
        %v702 = vld [vmem:[#allocation7 + $0x48] sm:$0xff]
        %v703 = vld [vmem:[#allocation7 + $0x50] sm:$0xff]
        %v704 = vld [vmem:[#allocation7 + $0x58] sm:$0xff]
        %v705 = vld [vmem:[#allocation7 + $0x60] sm:$0xff]
        %v706 = vld [vmem:[#allocation7 + $0x68] sm:$0xff]
        %v707 = vld [vmem:[#allocation7 + $0x70] sm:$0xff]
        %v708 = vld [vmem:[#allocation7 + $0x78] sm:$0xff]
        %v709 = vld [vmem:[#allocation2 + $0x10] sm:$0xff]
        %v710 = vld [vmem:[#allocation2 + $0x18] sm:$0xff]
        %s711 = scalar_lea.vmem [#allocation7], 128
        %v712 = vld [vmem:[%s711] sm:$0xff]
        %v713 = vld [vmem:[%s711 + $0x8] sm:$0xff]
        %v714 = vld [vmem:[%s711 + $0x10] sm:$0xff]
        %v715 = vld [vmem:[%s711 + $0x18] sm:$0xff]
        %v716 = vld [vmem:[%s711 + $0x20] sm:$0xff]
        %v717 = vld [vmem:[%s711 + $0x28] sm:$0xff]
        %v718 = vld [vmem:[%s711 + $0x30] sm:$0xff]
        %v719 = vld [vmem:[%s711 + $0x38] sm:$0xff]
        %v720 = vld [vmem:[%s711 + $0x40] sm:$0xff]
        %v721 = vld [vmem:[%s711 + $0x48] sm:$0xff]
        %v722 = vld [vmem:[%s711 + $0x50] sm:$0xff]
        %v723 = vld [vmem:[%s711 + $0x58] sm:$0xff]
        %v724 = vld [vmem:[%s711 + $0x60] sm:$0xff]
        %v725 = vld [vmem:[%s711 + $0x68] sm:$0xff]
        %v726 = vld [vmem:[%s711 + $0x70] sm:$0xff]
        %v727 = vld [vmem:[%s711 + $0x78] sm:$0xff]
        %728 = vmatprep.subr.mxu0 0.0
        %729 = vmatpush1.msra.mxu0 %v712
        %730 = vmatprep.subr.mxu0 0.0
        %731 = vmatpush1.msra.mxu0 %v713
        %732 = vmatprep.subr.mxu0 0.0
        %733 = vmatpush1.msra.mxu0 %v714
        %734 = vmatprep.subr.mxu0 0.0
        %735 = vmatpush1.msra.mxu0 %v715
        %736 = vmatprep.subr.mxu0 0.0
        %737 = vmatpush1.msra.mxu0 %v716
        %738 = vmatprep.subr.mxu0 0.0
        %739 = vmatpush1.msra.mxu0 %v717
        %740 = vmatprep.subr.mxu0 0.0
        %741 = vmatpush1.msra.mxu0 %v718
        %742 = vmatprep.subr.mxu0 0.0
        %743 = vmatpush1.msra.mxu0 %v719
        %744 = vmatprep.subr.mxu0 0.0
        %745 = vmatpush1.msra.mxu0 %v720
        %746 = vmatprep.subr.mxu0 0.0
        %747 = vmatpush1.msra.mxu0 %v721
        %748 = vmatprep.subr.mxu0 0.0
        %749 = vmatpush1.msra.mxu0 %v722
        %750 = vmatprep.subr.mxu0 0.0
        %751 = vmatpush1.msra.mxu0 %v723
        %752 = vmatprep.subr.mxu0 0.0
        %753 = vmatpush1.msra.mxu0 %v724
        %754 = vmatprep.subr.mxu0 0.0
        %755 = vmatpush1.msra.mxu0 %v725
        %756 = vmatprep.subr.mxu0 0.0
        %757 = vmatpush1.msra.mxu0 %v726
        %758 = vmatprep.subr.mxu0 0.0
        %759 = vmatpush1.msra.mxu0 %v727
        %760 = vmatprep.subr.mxu0 0.0
        %761 = vmatpush1.msra.mxu0 0.0
        %762 = vmatprep.subr.mxu0 0.0
        %763 = vmatpush1.msra.mxu0 0.0
        %764 = vmatprep.subr.mxu0 0.0
        %765 = vmatpush1.msra.mxu0 0.0
        %766 = vmatprep.subr.mxu0 0.0
        %767 = vmatpush1.msra.mxu0 0.0
        %768 = vmatprep.subr.mxu0 0.0
        %769 = vmatpush1.msra.mxu0 0.0
        %770 = vmatprep.subr.mxu0 0.0
        %771 = vmatpush1.msra.mxu0 0.0
        %772 = vmatprep.subr.mxu0 0.0
        %773 = vmatpush1.msra.mxu0 0.0
        %774 = vmatprep.subr.mxu0 0.0
        %775 = vmatpush1.msra.mxu0 0.0
        %776 = vmatprep.subr.mxu0 0.0
        %777 = vmatpush1.msra.mxu0 0.0
        %778 = vmatprep.subr.mxu0 0.0
        %779 = vmatpush1.msra.mxu0 0.0
        %780 = vmatprep.subr.mxu0 0.0
        %781 = vmatpush1.msra.mxu0 0.0
        %782 = vmatprep.subr.mxu0 0.0
        %783 = vmatpush1.msra.mxu0 0.0
        %784 = vmatprep.subr.mxu0 0.0
        %785 = vmatpush1.msra.mxu0 0.0
        %786 = vmatprep.subr.mxu0 0.0
        %787 = vmatpush1.msra.mxu0 0.0
        %788 = vmatprep.subr.mxu0 0.0
        %789 = vmatpush1.msra.mxu0 0.0
        %790 = vmatprep.subr.mxu0 0.0
        %791 = vmatpush1.msra.mxu0 0.0
        %792 = vmatprep.mubr.f32.mxu0 0.0
        %793 = vmatmul.mubr.f32.gmra.mrb[0].mxu0 %v709
        %v794 = vpop.f32.mrb[0].mxu0
        %v795 = vadd.f32 0.0, %v794
        %v796 = vpop.f32.mrb[0].mxu0
        %797 = vmatprep.mubr.f32.mxu0 0.0
        %798 = vmatmul.mubr.f32.gmra.mrb[0].mxu0 %v710
        %v799 = vpop.f32.mrb[0].mxu0
        %v800 = vadd.f32 0.0, %v799
        %v801 = vpop.f32.mrb[0].mxu0
        %802 = vdwg.mxu0
        %803 = vmatprep.subr.mxu0 0.0
        %804 = vmatpush1.msra.mxu0 %v693
        %805 = vmatprep.subr.mxu0 0.0
        %806 = vmatpush1.msra.mxu0 %v694
        %807 = vmatprep.subr.mxu0 0.0
        %808 = vmatpush1.msra.mxu0 %v695
        %809 = vmatprep.subr.mxu0 0.0
        %810 = vmatpush1.msra.mxu0 %v696
        %811 = vmatprep.subr.mxu0 0.0
        %812 = vmatpush1.msra.mxu0 %v697
        %813 = vmatprep.subr.mxu0 0.0
        %814 = vmatpush1.msra.mxu0 %v698
        %815 = vmatprep.subr.mxu0 0.0
        %816 = vmatpush1.msra.mxu0 %v699
        %817 = vmatprep.subr.mxu0 0.0
        %818 = vmatpush1.msra.mxu0 %v700
        %819 = vmatprep.subr.mxu0 0.0
        %820 = vmatpush1.msra.mxu0 %v701
        %821 = vmatprep.subr.mxu0 0.0
        %822 = vmatpush1.msra.mxu0 %v702
        %823 = vmatprep.subr.mxu0 0.0
        %824 = vmatpush1.msra.mxu0 %v703
        %825 = vmatprep.subr.mxu0 0.0
        %826 = vmatpush1.msra.mxu0 %v704
        %827 = vmatprep.subr.mxu0 0.0
        %828 = vmatpush1.msra.mxu0 %v705
        %829 = vmatprep.subr.mxu0 0.0
        %830 = vmatpush1.msra.mxu0 %v706
        %831 = vmatprep.subr.mxu0 0.0
        %832 = vmatpush1.msra.mxu0 %v707
        %833 = vmatprep.subr.mxu0 0.0
        %834 = vmatpush1.msra.mxu0 %v708
        %835 = vmatprep.subr.mxu0 0.0
        %836 = vmatpush1.msra.mxu0 0.0
        %837 = vmatprep.subr.mxu0 0.0
        %838 = vmatpush1.msra.mxu0 0.0
        %839 = vmatprep.subr.mxu0 0.0
        %840 = vmatpush1.msra.mxu0 0.0
        %841 = vmatprep.subr.mxu0 0.0
        %842 = vmatpush1.msra.mxu0 0.0
        %843 = vmatprep.subr.mxu0 0.0
        %844 = vmatpush1.msra.mxu0 0.0
        %845 = vmatprep.subr.mxu0 0.0
        %846 = vmatpush1.msra.mxu0 0.0
        %847 = vmatprep.subr.mxu0 0.0
        %848 = vmatpush1.msra.mxu0 0.0
        %849 = vmatprep.subr.mxu0 0.0
        %850 = vmatpush1.msra.mxu0 0.0
        %851 = vmatprep.subr.mxu0 0.0
        %852 = vmatpush1.msra.mxu0 0.0
        %853 = vmatprep.subr.mxu0 0.0
        %854 = vmatpush1.msra.mxu0 0.0
        %855 = vmatprep.subr.mxu0 0.0
        %856 = vmatpush1.msra.mxu0 0.0
        %857 = vmatprep.subr.mxu0 0.0
        %858 = vmatpush1.msra.mxu0 0.0
        %859 = vmatprep.subr.mxu0 0.0
        %860 = vmatpush1.msra.mxu0 0.0
        %861 = vmatprep.subr.mxu0 0.0
        %862 = vmatpush1.msra.mxu0 0.0
        %863 = vmatprep.subr.mxu0 0.0
        %864 = vmatpush1.msra.mxu0 0.0
        %865 = vmatprep.subr.mxu0 0.0
        %866 = vmatpush1.msra.mxu0 0.0
        %867 = vmatprep.mubr.f32.mxu0 0.0
        %868 = vmatmul.mubr.f32.gmra.mrb[0].mxu0 %v691
        %v869 = vpop.f32.mrb[0].mxu0
        %v870 = vadd.f32 %v795, %v869
        %v871 = vpop.f32.mrb[0].mxu0
        %872 = vmatprep.mubr.f32.mxu0 0.0
        %873 = vmatmul.mubr.f32.gmra.mrb[0].mxu0 %v692
        %v874 = vpop.f32.mrb[0].mxu0
        %v875 = vadd.f32 %v800, %v874
        %v876 = vpop.f32.mrb[0].mxu0
        %877 = vdwg.mxu0
        %v878 = vld [vmem:[%s2] sm:$0x1]
        %v880 = vlaneseq
        %v881 = vshrl.u32 %v880, 7
        %v882 = vsub.s32 0, %v881
        %v883 = vrot.slane %v878, %v882
        %v885 = vadd.f32 %v870, %v883
        %v886 = vadd.f32 %v875, %v883
        %v887 = vmax.f32 %v885, 0.0
        %v888 = vmax.f32 %v886, 0.0
        %889 = vst [vmem:[#allocation3 + $0x10] sm:$0xff] %v887
        %890 = vst [vmem:[#allocation3 + $0x18] sm:$0xff] %v888
        %v891 = vld [vmem:[#allocation3 + $0xf] sm:$0xff]
        %v892 = vld [vmem:[#allocation3 + $0x17] sm:$0xff]
        %v893 = vld [vmem:[#allocation9] sm:$0xff]
        %v894 = vld [vmem:[#allocation9 + $0x8] sm:$0xff]
        %v895 = vld [vmem:[#allocation9 + $0x10] sm:$0xff]
        %v896 = vld [vmem:[#allocation9 + $0x18] sm:$0xff]
        %v897 = vld [vmem:[#allocation9 + $0x20] sm:$0xff]
        %v898 = vld [vmem:[#allocation9 + $0x28] sm:$0xff]
        %v899 = vld [vmem:[#allocation9 + $0x30] sm:$0xff]
        %v900 = vld [vmem:[#allocation9 + $0x38] sm:$0xff]
        %v901 = vld [vmem:[#allocation9 + $0x40] sm:$0xff]
        %v902 = vld [vmem:[#allocation9 + $0x48] sm:$0xff]
        %v903 = vld [vmem:[#allocation9 + $0x50] sm:$0xff]
        %v904 = vld [vmem:[#allocation9 + $0x58] sm:$0xff]
        %v905 = vld [vmem:[#allocation9 + $0x60] sm:$0xff]
        %v906 = vld [vmem:[#allocation9 + $0x68] sm:$0xff]
        %v907 = vld [vmem:[#allocation9 + $0x70] sm:$0xff]
        %v908 = vld [vmem:[#allocation9 + $0x78] sm:$0xff]
        %v909 = vld [vmem:[#allocation3 + $0x10] sm:$0xff]
        %v910 = vld [vmem:[#allocation3 + $0x18] sm:$0xff]
        %s911 = scalar_lea.vmem [#allocation9], 128
        %v912 = vld [vmem:[%s911] sm:$0xff]
        %v913 = vld [vmem:[%s911 + $0x8] sm:$0xff]
        %v914 = vld [vmem:[%s911 + $0x10] sm:$0xff]
        %v915 = vld [vmem:[%s911 + $0x18] sm:$0xff]
        %v916 = vld [vmem:[%s911 + $0x20] sm:$0xff]
        %v917 = vld [vmem:[%s911 + $0x28] sm:$0xff]
        %v918 = vld [vmem:[%s911 + $0x30] sm:$0xff]
        %v919 = vld [vmem:[%s911 + $0x38] sm:$0xff]
        %v920 = vld [vmem:[%s911 + $0x40] sm:$0xff]
        %v921 = vld [vmem:[%s911 + $0x48] sm:$0xff]
        %v922 = vld [vmem:[%s911 + $0x50] sm:$0xff]
        %v923 = vld [vmem:[%s911 + $0x58] sm:$0xff]
        %v924 = vld [vmem:[%s911 + $0x60] sm:$0xff]
        %v925 = vld [vmem:[%s911 + $0x68] sm:$0xff]
        %v926 = vld [vmem:[%s911 + $0x70] sm:$0xff]
        %v927 = vld [vmem:[%s911 + $0x78] sm:$0xff]
        %928 = vmatprep.subr.mxu0 0.0
        %929 = vmatpush1.msra.mxu0 %v912
        %930 = vmatprep.subr.mxu0 0.0
        %931 = vmatpush1.msra.mxu0 %v913
        %932 = vmatprep.subr.mxu0 0.0
        %933 = vmatpush1.msra.mxu0 %v914
        %934 = vmatprep.subr.mxu0 0.0
        %935 = vmatpush1.msra.mxu0 %v915
        %936 = vmatprep.subr.mxu0 0.0
        %937 = vmatpush1.msra.mxu0 %v916
        %938 = vmatprep.subr.mxu0 0.0
        %939 = vmatpush1.msra.mxu0 %v917
        %940 = vmatprep.subr.mxu0 0.0
        %941 = vmatpush1.msra.mxu0 %v918
        %942 = vmatprep.subr.mxu0 0.0
        %943 = vmatpush1.msra.mxu0 %v919
        %944 = vmatprep.subr.mxu0 0.0
        %945 = vmatpush1.msra.mxu0 %v920
        %946 = vmatprep.subr.mxu0 0.0
        %947 = vmatpush1.msra.mxu0 %v921
        %948 = vmatprep.subr.mxu0 0.0
        %949 = vmatpush1.msra.mxu0 %v922
        %950 = vmatprep.subr.mxu0 0.0
        %951 = vmatpush1.msra.mxu0 %v923
        %952 = vmatprep.subr.mxu0 0.0
        %953 = vmatpush1.msra.mxu0 %v924
        %954 = vmatprep.subr.mxu0 0.0
        %955 = vmatpush1.msra.mxu0 %v925
        %956 = vmatprep.subr.mxu0 0.0
        %957 = vmatpush1.msra.mxu0 %v926
        %958 = vmatprep.subr.mxu0 0.0
        %959 = vmatpush1.msra.mxu0 %v927
        %960 = vmatprep.subr.mxu0 0.0
        %961 = vmatpush1.msra.mxu0 0.0
        %962 = vmatprep.subr.mxu0 0.0
        %963 = vmatpush1.msra.mxu0 0.0
        %964 = vmatprep.subr.mxu0 0.0
        %965 = vmatpush1.msra.mxu0 0.0
        %966 = vmatprep.subr.mxu0 0.0
        %967 = vmatpush1.msra.mxu0 0.0
        %968 = vmatprep.subr.mxu0 0.0
        %969 = vmatpush1.msra.mxu0 0.0
        %970 = vmatprep.subr.mxu0 0.0
        %971 = vmatpush1.msra.mxu0 0.0
        %972 = vmatprep.subr.mxu0 0.0
        %973 = vmatpush1.msra.mxu0 0.0
        %974 = vmatprep.subr.mxu0 0.0
        %975 = vmatpush1.msra.mxu0 0.0
        %976 = vmatprep.subr.mxu0 0.0
        %977 = vmatpush1.msra.mxu0 0.0
        %978 = vmatprep.subr.mxu0 0.0
        %979 = vmatpush1.msra.mxu0 0.0
        %980 = vmatprep.subr.mxu0 0.0
        %981 = vmatpush1.msra.mxu0 0.0
        %982 = vmatprep.subr.mxu0 0.0
        %983 = vmatpush1.msra.mxu0 0.0
        %984 = vmatprep.subr.mxu0 0.0
        %985 = vmatpush1.msra.mxu0 0.0
        %986 = vmatprep.subr.mxu0 0.0
        %987 = vmatpush1.msra.mxu0 0.0
        %988 = vmatprep.subr.mxu0 0.0
        %989 = vmatpush1.msra.mxu0 0.0
        %990 = vmatprep.subr.mxu0 0.0
        %991 = vmatpush1.msra.mxu0 0.0
        %992 = vmatprep.mubr.f32.mxu0 0.0
        %993 = vmatmul.mubr.f32.gmra.mrb[0].mxu0 %v909
        %v994 = vpop.f32.mrb[0].mxu0
        %v995 = vadd.f32 0.0, %v994
        %v996 = vpop.f32.mrb[0].mxu0
        %997 = vmatprep.mubr.f32.mxu0 0.0
        %998 = vmatmul.mubr.f32.gmra.mrb[0].mxu0 %v910
        %v999 = vpop.f32.mrb[0].mxu0
        %v1000 = vadd.f32 0.0, %v999
        %v1001 = vpop.f32.mrb[0].mxu0
        %1002 = vdwg.mxu0
        %1003 = vmatprep.subr.mxu0 0.0
        %1004 = vmatpush1.msra.mxu0 %v893
        %1005 = vmatprep.subr.mxu0 0.0
        %1006 = vmatpush1.msra.mxu0 %v894
        %1007 = vmatprep.subr.mxu0 0.0
        %1008 = vmatpush1.msra.mxu0 %v895
        %1009 = vmatprep.subr.mxu0 0.0
        %1010 = vmatpush1.msra.mxu0 %v896
        %1011 = vmatprep.subr.mxu0 0.0
        %1012 = vmatpush1.msra.mxu0 %v897
        %1013 = vmatprep.subr.mxu0 0.0
        %1014 = vmatpush1.msra.mxu0 %v898
        %1015 = vmatprep.subr.mxu0 0.0
        %1016 = vmatpush1.msra.mxu0 %v899
        %1017 = vmatprep.subr.mxu0 0.0
        %1018 = vmatpush1.msra.mxu0 %v900
        %1019 = vmatprep.subr.mxu0 0.0
        %1020 = vmatpush1.msra.mxu0 %v901
        %1021 = vmatprep.subr.mxu0 0.0
        %1022 = vmatpush1.msra.mxu0 %v902
        %1023 = vmatprep.subr.mxu0 0.0
        %1024 = vmatpush1.msra.mxu0 %v903
        %1025 = vmatprep.subr.mxu0 0.0
        %1026 = vmatpush1.msra.mxu0 %v904
        %1027 = vmatprep.subr.mxu0 0.0
        %1028 = vmatpush1.msra.mxu0 %v905
        %1029 = vmatprep.subr.mxu0 0.0
        %1030 = vmatpush1.msra.mxu0 %v906
        %1031 = vmatprep.subr.mxu0 0.0
        %1032 = vmatpush1.msra.mxu0 %v907
        %1033 = vmatprep.subr.mxu0 0.0
        %1034 = vmatpush1.msra.mxu0 %v908
        %1035 = vmatprep.subr.mxu0 0.0
        %1036 = vmatpush1.msra.mxu0 0.0
        %1037 = vmatprep.subr.mxu0 0.0
        %1038 = vmatpush1.msra.mxu0 0.0
        %1039 = vmatprep.subr.mxu0 0.0
        %1040 = vmatpush1.msra.mxu0 0.0
        %1041 = vmatprep.subr.mxu0 0.0
        %1042 = vmatpush1.msra.mxu0 0.0
        %1043 = vmatprep.subr.mxu0 0.0
        %1044 = vmatpush1.msra.mxu0 0.0
        %1045 = vmatprep.subr.mxu0 0.0
        %1046 = vmatpush1.msra.mxu0 0.0
        %1047 = vmatprep.subr.mxu0 0.0
        %1048 = vmatpush1.msra.mxu0 0.0
        %1049 = vmatprep.subr.mxu0 0.0
        %1050 = vmatpush1.msra.mxu0 0.0
        %1051 = vmatprep.subr.mxu0 0.0
        %1052 = vmatpush1.msra.mxu0 0.0
        %1053 = vmatprep.subr.mxu0 0.0
        %1054 = vmatpush1.msra.mxu0 0.0
        %1055 = vmatprep.subr.mxu0 0.0
        %1056 = vmatpush1.msra.mxu0 0.0
        %1057 = vmatprep.subr.mxu0 0.0
        %1058 = vmatpush1.msra.mxu0 0.0
        %1059 = vmatprep.subr.mxu0 0.0
        %1060 = vmatpush1.msra.mxu0 0.0
        %1061 = vmatprep.subr.mxu0 0.0
        %1062 = vmatpush1.msra.mxu0 0.0
        %1063 = vmatprep.subr.mxu0 0.0
        %1064 = vmatpush1.msra.mxu0 0.0
        %1065 = vmatprep.subr.mxu0 0.0
        %1066 = vmatpush1.msra.mxu0 0.0
        %1067 = vmatprep.mubr.f32.mxu0 0.0
        %1068 = vmatmul.mubr.f32.gmra.mrb[0].mxu0 %v891
        %v1069 = vpop.f32.mrb[0].mxu0
        %v1070 = vadd.f32 %v995, %v1069
        %v1071 = vpop.f32.mrb[0].mxu0
        %1072 = vmatprep.mubr.f32.mxu0 0.0
        %1073 = vmatmul.mubr.f32.gmra.mrb[0].mxu0 %v892
        %v1074 = vpop.f32.mrb[0].mxu0
        %v1075 = vadd.f32 %v1000, %v1074
        %v1076 = vpop.f32.mrb[0].mxu0
        %1077 = vdwg.mxu0
        %v1078 = vld [vmem:[%s4] sm:$0x1]
        %v1080 = vlaneseq
        %v1081 = vshrl.u32 %v1080, 7
        %v1082 = vsub.s32 0, %v1081
        %v1083 = vrot.slane %v1078, %v1082
        %v1085 = vadd.f32 %v1070, %v1083
        %v1086 = vadd.f32 %v1075, %v1083
        %v1087 = vmax.f32 %v1085, 0.0
        %v1088 = vmax.f32 %v1086, 0.0
        %v1089 = vld [vmem:[#allocation2 + $0x10] sm:$0xff]
        %v1090 = vld [vmem:[#allocation2 + $0x18] sm:$0xff]
        %v1091 = vld [vmem:[#allocation10] sm:$0xff]
        %v1092 = vld [vmem:[#allocation10 + $0x8] sm:$0xff]
        %v1093 = vld [vmem:[#allocation10 + $0x10] sm:$0xff]
        %v1094 = vld [vmem:[#allocation10 + $0x18] sm:$0xff]
        %v1095 = vld [vmem:[#allocation10 + $0x20] sm:$0xff]
        %v1096 = vld [vmem:[#allocation10 + $0x28] sm:$0xff]
        %v1097 = vld [vmem:[#allocation10 + $0x30] sm:$0xff]
        %v1098 = vld [vmem:[#allocation10 + $0x38] sm:$0xff]
        %v1099 = vld [vmem:[#allocation10 + $0x40] sm:$0xff]
        %v1100 = vld [vmem:[#allocation10 + $0x48] sm:$0xff]
        %v1101 = vld [vmem:[#allocation10 + $0x50] sm:$0xff]
        %v1102 = vld [vmem:[#allocation10 + $0x58] sm:$0xff]
        %v1103 = vld [vmem:[#allocation10 + $0x60] sm:$0xff]
        %v1104 = vld [vmem:[#allocation10 + $0x68] sm:$0xff]
        %v1105 = vld [vmem:[#allocation10 + $0x70] sm:$0xff]
        %v1106 = vld [vmem:[#allocation10 + $0x78] sm:$0xff]
        %v1107 = vld [vmem:[%s6] sm:$0x1]
        %v1109 = vlaneseq
        %v1110 = vshrl.u32 %v1109, 7
        %v1111 = vsub.s32 0, %v1110
        %v1112 = vrot.slane %v1107, %v1111
        %1114 = vmatprep.subr.mxu0 0.0
        %1115 = vmatpush1.msra.mxu0 %v1091
        %1116 = vmatprep.subr.mxu0 0.0
        %1117 = vmatpush1.msra.mxu0 %v1092
        %1118 = vmatprep.subr.mxu0 0.0
        %1119 = vmatpush1.msra.mxu0 %v1093
        %1120 = vmatprep.subr.mxu0 0.0
        %1121 = vmatpush1.msra.mxu0 %v1094
        %1122 = vmatprep.subr.mxu0 0.0
        %1123 = vmatpush1.msra.mxu0 %v1095
        %1124 = vmatprep.subr.mxu0 0.0
        %1125 = vmatpush1.msra.mxu0 %v1096
        %1126 = vmatprep.subr.mxu0 0.0
        %1127 = vmatpush1.msra.mxu0 %v1097
        %1128 = vmatprep.subr.mxu0 0.0
        %1129 = vmatpush1.msra.mxu0 %v1098
        %1130 = vmatprep.subr.mxu0 0.0
        %1131 = vmatpush1.msra.mxu0 %v1099
        %1132 = vmatprep.subr.mxu0 0.0
        %1133 = vmatpush1.msra.mxu0 %v1100
        %1134 = vmatprep.subr.mxu0 0.0
        %1135 = vmatpush1.msra.mxu0 %v1101
        %1136 = vmatprep.subr.mxu0 0.0
        %1137 = vmatpush1.msra.mxu0 %v1102
        %1138 = vmatprep.subr.mxu0 0.0
        %1139 = vmatpush1.msra.mxu0 %v1103
        %1140 = vmatprep.subr.mxu0 0.0
        %1141 = vmatpush1.msra.mxu0 %v1104
        %1142 = vmatprep.subr.mxu0 0.0
        %1143 = vmatpush1.msra.mxu0 %v1105
        %1144 = vmatprep.subr.mxu0 0.0
        %1145 = vmatpush1.msra.mxu0 %v1106
        %1146 = vmatprep.subr.mxu0 0.0
        %1147 = vmatpush1.msra.mxu0 0.0
        %1148 = vmatprep.subr.mxu0 0.0
        %1149 = vmatpush1.msra.mxu0 0.0
        %1150 = vmatprep.subr.mxu0 0.0
        %1151 = vmatpush1.msra.mxu0 0.0
        %1152 = vmatprep.subr.mxu0 0.0
        %1153 = vmatpush1.msra.mxu0 0.0
        %1154 = vmatprep.subr.mxu0 0.0
        %1155 = vmatpush1.msra.mxu0 0.0
        %1156 = vmatprep.subr.mxu0 0.0
        %1157 = vmatpush1.msra.mxu0 0.0
        %1158 = vmatprep.subr.mxu0 0.0
        %1159 = vmatpush1.msra.mxu0 0.0
        %1160 = vmatprep.subr.mxu0 0.0
        %1161 = vmatpush1.msra.mxu0 0.0
        %1162 = vmatprep.subr.mxu0 0.0
        %1163 = vmatpush1.msra.mxu0 0.0
        %1164 = vmatprep.subr.mxu0 0.0
        %1165 = vmatpush1.msra.mxu0 0.0
        %1166 = vmatprep.subr.mxu0 0.0
        %1167 = vmatpush1.msra.mxu0 0.0
        %1168 = vmatprep.subr.mxu0 0.0
        %1169 = vmatpush1.msra.mxu0 0.0
        %1170 = vmatprep.subr.mxu0 0.0
        %1171 = vmatpush1.msra.mxu0 0.0
        %1172 = vmatprep.subr.mxu0 0.0
        %1173 = vmatpush1.msra.mxu0 0.0
        %1174 = vmatprep.subr.mxu0 0.0
        %1175 = vmatpush1.msra.mxu0 0.0
        %1176 = vmatprep.subr.mxu0 0.0
        %1177 = vmatpush1.msra.mxu0 0.0
        %1178 = vmatprep.mubr.f32.mxu0 0.0
        %1179 = vmatmul.mubr.f32.gmra.mrb[0].mxu0 %v1089
        %v1180 = vpop.f32.mrb[0].mxu0
        %v1181 = vadd.f32 %v1112, %v1180
        %v1182 = vpop.f32.mrb[0].mxu0
        %1183 = vmatprep.mubr.f32.mxu0 0.0
        %1184 = vmatmul.mubr.f32.gmra.mrb[0].mxu0 %v1090
        %v1185 = vpop.f32.mrb[0].mxu0
        %v1186 = vadd.f32 %v1112, %v1185
        %v1187 = vpop.f32.mrb[0].mxu0
        %1188 = vdwg.mxu0
        %v1189 = vadd.f32 %v1087, %v1181
        %v1190 = vadd.f32 %v1088, %v1186
        %v1191 = vmax.f32 %v1189, 0.0
        %v1192 = vmax.f32 %v1190, 0.0
        %1193 = vst [vmem:[#allocation2 + $0x10] sm:$0xff] %v1191
        %1194 = vst [vmem:[#allocation2 + $0x18] sm:$0xff] %v1192
        %v1195 = vld [vmem:[#allocation2 + $0xe] sm:$0xff]
        %v1196 = vld [vmem:[#allocation2 + $0x16] sm:$0xff]
        %v1197 = vld [vmem:[#allocation12] sm:$0xff]
        %v1198 = vld [vmem:[#allocation12 + $0x8] sm:$0xff]
        %v1199 = vld [vmem:[#allocation12 + $0x10] sm:$0xff]
        %v1200 = vld [vmem:[#allocation12 + $0x18] sm:$0xff]
        %v1201 = vld [vmem:[#allocation12 + $0x20] sm:$0xff]
        %v1202 = vld [vmem:[#allocation12 + $0x28] sm:$0xff]
        %v1203 = vld [vmem:[#allocation12 + $0x30] sm:$0xff]
        %v1204 = vld [vmem:[#allocation12 + $0x38] sm:$0xff]
        %v1205 = vld [vmem:[#allocation12 + $0x40] sm:$0xff]
        %v1206 = vld [vmem:[#allocation12 + $0x48] sm:$0xff]
        %v1207 = vld [vmem:[#allocation12 + $0x50] sm:$0xff]
        %v1208 = vld [vmem:[#allocation12 + $0x58] sm:$0xff]
        %v1209 = vld [vmem:[#allocation12 + $0x60] sm:$0xff]
        %v1210 = vld [vmem:[#allocation12 + $0x68] sm:$0xff]
        %v1211 = vld [vmem:[#allocation12 + $0x70] sm:$0xff]
        %v1212 = vld [vmem:[#allocation12 + $0x78] sm:$0xff]
        %v1213 = vld [vmem:[#allocation2 + $0x10] sm:$0xff]
        %v1214 = vld [vmem:[#allocation2 + $0x18] sm:$0xff]
        %s1215 = scalar_lea.vmem [#allocation12], 128
        %v1216 = vld [vmem:[%s1215] sm:$0xff]
        %v1217 = vld [vmem:[%s1215 + $0x8] sm:$0xff]
        %v1218 = vld [vmem:[%s1215 + $0x10] sm:$0xff]
        %v1219 = vld [vmem:[%s1215 + $0x18] sm:$0xff]
        %v1220 = vld [vmem:[%s1215 + $0x20] sm:$0xff]
        %v1221 = vld [vmem:[%s1215 + $0x28] sm:$0xff]
        %v1222 = vld [vmem:[%s1215 + $0x30] sm:$0xff]
        %v1223 = vld [vmem:[%s1215 + $0x38] sm:$0xff]
        %v1224 = vld [vmem:[%s1215 + $0x40] sm:$0xff]
        %v1225 = vld [vmem:[%s1215 + $0x48] sm:$0xff]
        %v1226 = vld [vmem:[%s1215 + $0x50] sm:$0xff]
        %v1227 = vld [vmem:[%s1215 + $0x58] sm:$0xff]
        %v1228 = vld [vmem:[%s1215 + $0x60] sm:$0xff]
        %v1229 = vld [vmem:[%s1215 + $0x68] sm:$0xff]
        %v1230 = vld [vmem:[%s1215 + $0x70] sm:$0xff]
        %v1231 = vld [vmem:[%s1215 + $0x78] sm:$0xff]
        %1232 = vmatprep.subr.mxu0 0.0
        %1233 = vmatpush1.msra.mxu0 %v1216
        %1234 = vmatprep.subr.mxu0 0.0
        %1235 = vmatpush1.msra.mxu0 %v1217
        %1236 = vmatprep.subr.mxu0 0.0
        %1237 = vmatpush1.msra.mxu0 %v1218
        %1238 = vmatprep.subr.mxu0 0.0
        %1239 = vmatpush1.msra.mxu0 %v1219
        %1240 = vmatprep.subr.mxu0 0.0
        %1241 = vmatpush1.msra.mxu0 %v1220
        %1242 = vmatprep.subr.mxu0 0.0
        %1243 = vmatpush1.msra.mxu0 %v1221
        %1244 = vmatprep.subr.mxu0 0.0
        %1245 = vmatpush1.msra.mxu0 %v1222
        %1246 = vmatprep.subr.mxu0 0.0
        %1247 = vmatpush1.msra.mxu0 %v1223
        %1248 = vmatprep.subr.mxu0 0.0
        %1249 = vmatpush1.msra.mxu0 %v1224
        %1250 = vmatprep.subr.mxu0 0.0
        %1251 = vmatpush1.msra.mxu0 %v1225
        %1252 = vmatprep.subr.mxu0 0.0
        %1253 = vmatpush1.msra.mxu0 %v1226
        %1254 = vmatprep.subr.mxu0 0.0
        %1255 = vmatpush1.msra.mxu0 %v1227
        %1256 = vmatprep.subr.mxu0 0.0
        %1257 = vmatpush1.msra.mxu0 %v1228
        %1258 = vmatprep.subr.mxu0 0.0
        %1259 = vmatpush1.msra.mxu0 %v1229
        %1260 = vmatprep.subr.mxu0 0.0
        %1261 = vmatpush1.msra.mxu0 %v1230
        %1262 = vmatprep.subr.mxu0 0.0
        %1263 = vmatpush1.msra.mxu0 %v1231
        %1264 = vmatprep.subr.mxu0 0.0
        %1265 = vmatpush1.msra.mxu0 0.0
        %1266 = vmatprep.subr.mxu0 0.0
        %1267 = vmatpush1.msra.mxu0 0.0
        %1268 = vmatprep.subr.mxu0 0.0
        %1269 = vmatpush1.msra.mxu0 0.0
        %1270 = vmatprep.subr.mxu0 0.0
        %1271 = vmatpush1.msra.mxu0 0.0
        %1272 = vmatprep.subr.mxu0 0.0
        %1273 = vmatpush1.msra.mxu0 0.0
        %1274 = vmatprep.subr.mxu0 0.0
        %1275 = vmatpush1.msra.mxu0 0.0
        %1276 = vmatprep.subr.mxu0 0.0
        %1277 = vmatpush1.msra.mxu0 0.0
        %1278 = vmatprep.subr.mxu0 0.0
        %1279 = vmatpush1.msra.mxu0 0.0
        %1280 = vmatprep.subr.mxu0 0.0
        %1281 = vmatpush1.msra.mxu0 0.0
        %1282 = vmatprep.subr.mxu0 0.0
        %1283 = vmatpush1.msra.mxu0 0.0
        %1284 = vmatprep.subr.mxu0 0.0
        %1285 = vmatpush1.msra.mxu0 0.0
        %1286 = vmatprep.subr.mxu0 0.0
        %1287 = vmatpush1.msra.mxu0 0.0
        %1288 = vmatprep.subr.mxu0 0.0
        %1289 = vmatpush1.msra.mxu0 0.0
        %1290 = vmatprep.subr.mxu0 0.0
        %1291 = vmatpush1.msra.mxu0 0.0
        %1292 = vmatprep.subr.mxu0 0.0
        %1293 = vmatpush1.msra.mxu0 0.0
        %1294 = vmatprep.subr.mxu0 0.0
        %1295 = vmatpush1.msra.mxu0 0.0
        %1296 = vmatprep.mubr.f32.mxu0 0.0
        %1297 = vmatmul.mubr.f32.gmra.mrb[0].mxu0 %v1213
        %v1298 = vpop.f32.mrb[0].mxu0
        %v1299 = vadd.f32 0.0, %v1298
        %v1300 = vpop.f32.mrb[0].mxu0
        %1301 = vmatprep.mubr.f32.mxu0 0.0
        %1302 = vmatmul.mubr.f32.gmra.mrb[0].mxu0 %v1214
        %v1303 = vpop.f32.mrb[0].mxu0
        %v1304 = vadd.f32 0.0, %v1303
        %v1305 = vpop.f32.mrb[0].mxu0
        %1306 = vdwg.mxu0
        %1307 = vmatprep.subr.mxu0 0.0
        %1308 = vmatpush1.msra.mxu0 %v1197
        %1309 = vmatprep.subr.mxu0 0.0
        %1310 = vmatpush1.msra.mxu0 %v1198
        %1311 = vmatprep.subr.mxu0 0.0
        %1312 = vmatpush1.msra.mxu0 %v1199
        %1313 = vmatprep.subr.mxu0 0.0
        %1314 = vmatpush1.msra.mxu0 %v1200
        %1315 = vmatprep.subr.mxu0 0.0
        %1316 = vmatpush1.msra.mxu0 %v1201
        %1317 = vmatprep.subr.mxu0 0.0
        %1318 = vmatpush1.msra.mxu0 %v1202
        %1319 = vmatprep.subr.mxu0 0.0
        %1320 = vmatpush1.msra.mxu0 %v1203
        %1321 = vmatprep.subr.mxu0 0.0
        %1322 = vmatpush1.msra.mxu0 %v1204
        %1323 = vmatprep.subr.mxu0 0.0
        %1324 = vmatpush1.msra.mxu0 %v1205
        %1325 = vmatprep.subr.mxu0 0.0
        %1326 = vmatpush1.msra.mxu0 %v1206
        %1327 = vmatprep.subr.mxu0 0.0
        %1328 = vmatpush1.msra.mxu0 %v1207
        %1329 = vmatprep.subr.mxu0 0.0
        %1330 = vmatpush1.msra.mxu0 %v1208
        %1331 = vmatprep.subr.mxu0 0.0
        %1332 = vmatpush1.msra.mxu0 %v1209
        %1333 = vmatprep.subr.mxu0 0.0
        %1334 = vmatpush1.msra.mxu0 %v1210
        %1335 = vmatprep.subr.mxu0 0.0
        %1336 = vmatpush1.msra.mxu0 %v1211
        %1337 = vmatprep.subr.mxu0 0.0
        %1338 = vmatpush1.msra.mxu0 %v1212
        %1339 = vmatprep.subr.mxu0 0.0
        %1340 = vmatpush1.msra.mxu0 0.0
        %1341 = vmatprep.subr.mxu0 0.0
        %1342 = vmatpush1.msra.mxu0 0.0
        %1343 = vmatprep.subr.mxu0 0.0
        %1344 = vmatpush1.msra.mxu0 0.0
        %1345 = vmatprep.subr.mxu0 0.0
        %1346 = vmatpush1.msra.mxu0 0.0
        %1347 = vmatprep.subr.mxu0 0.0
        %1348 = vmatpush1.msra.mxu0 0.0
        %1349 = vmatprep.subr.mxu0 0.0
        %1350 = vmatpush1.msra.mxu0 0.0
        %1351 = vmatprep.subr.mxu0 0.0
        %1352 = vmatpush1.msra.mxu0 0.0
        %1353 = vmatprep.subr.mxu0 0.0
        %1354 = vmatpush1.msra.mxu0 0.0
        %1355 = vmatprep.subr.mxu0 0.0
        %1356 = vmatpush1.msra.mxu0 0.0
        %1357 = vmatprep.subr.mxu0 0.0
        %1358 = vmatpush1.msra.mxu0 0.0
        %1359 = vmatprep.subr.mxu0 0.0
        %1360 = vmatpush1.msra.mxu0 0.0
        %1361 = vmatprep.subr.mxu0 0.0
        %1362 = vmatpush1.msra.mxu0 0.0
        %1363 = vmatprep.subr.mxu0 0.0
        %1364 = vmatpush1.msra.mxu0 0.0
        %1365 = vmatprep.subr.mxu0 0.0
        %1366 = vmatpush1.msra.mxu0 0.0
        %1367 = vmatprep.subr.mxu0 0.0
        %1368 = vmatpush1.msra.mxu0 0.0
        %1369 = vmatprep.subr.mxu0 0.0
        %1370 = vmatpush1.msra.mxu0 0.0
        %1371 = vmatprep.mubr.f32.mxu0 0.0
        %1372 = vmatmul.mubr.f32.gmra.mrb[0].mxu0 %v1195
        %v1373 = vpop.f32.mrb[0].mxu0
        %v1374 = vadd.f32 %v1299, %v1373
        %v1375 = vpop.f32.mrb[0].mxu0
        %1376 = vmatprep.mubr.f32.mxu0 0.0
        %1377 = vmatmul.mubr.f32.gmra.mrb[0].mxu0 %v1196
        %v1378 = vpop.f32.mrb[0].mxu0
        %v1379 = vadd.f32 %v1304, %v1378
        %v1380 = vpop.f32.mrb[0].mxu0
        %1381 = vdwg.mxu0
        %v1382 = vld [vmem:[%s8] sm:$0x1]
        %v1384 = vlaneseq
        %v1385 = vshrl.u32 %v1384, 7
        %v1386 = vsub.s32 0, %v1385
        %v1387 = vrot.slane %v1382, %v1386
        %v1389 = vadd.f32 %v1374, %v1387
        %v1390 = vadd.f32 %v1379, %v1387
        %v1391 = vmax.f32 %v1389, 0.0
        %v1392 = vmax.f32 %v1390, 0.0
        %1393 = vst [vmem:[#allocation3 + $0x10] sm:$0xff] %v1391
        %1394 = vst [vmem:[#allocation3 + $0x18] sm:$0xff] %v1392
        %v1395 = vld [vmem:[#allocation3 + $0xe] sm:$0xff]
        %v1396 = vld [vmem:[#allocation3 + $0x16] sm:$0xff]
        %v1397 = vld [vmem:[#allocation13] sm:$0xff]
        %v1398 = vld [vmem:[#allocation13 + $0x8] sm:$0xff]
        %v1399 = vld [vmem:[#allocation13 + $0x10] sm:$0xff]
        %v1400 = vld [vmem:[#allocation13 + $0x18] sm:$0xff]
        %v1401 = vld [vmem:[#allocation13 + $0x20] sm:$0xff]
        %v1402 = vld [vmem:[#allocation13 + $0x28] sm:$0xff]
        %v1403 = vld [vmem:[#allocation13 + $0x30] sm:$0xff]
        %v1404 = vld [vmem:[#allocation13 + $0x38] sm:$0xff]
        %v1405 = vld [vmem:[#allocation13 + $0x40] sm:$0xff]
        %v1406 = vld [vmem:[#allocation13 + $0x48] sm:$0xff]
        %v1407 = vld [vmem:[#allocation13 + $0x50] sm:$0xff]
        %v1408 = vld [vmem:[#allocation13 + $0x58] sm:$0xff]
        %v1409 = vld [vmem:[#allocation13 + $0x60] sm:$0xff]
        %v1410 = vld [vmem:[#allocation13 + $0x68] sm:$0xff]
        %v1411 = vld [vmem:[#allocation13 + $0x70] sm:$0xff]
        %v1412 = vld [vmem:[#allocation13 + $0x78] sm:$0xff]
        %v1413 = vld [vmem:[#allocation3 + $0x10] sm:$0xff]
        %v1414 = vld [vmem:[#allocation3 + $0x18] sm:$0xff]
        %s1415 = scalar_lea.vmem [#allocation13], 128
        %v1416 = vld [vmem:[%s1415] sm:$0xff]
        %v1417 = vld [vmem:[%s1415 + $0x8] sm:$0xff]
        %v1418 = vld [vmem:[%s1415 + $0x10] sm:$0xff]
        %v1419 = vld [vmem:[%s1415 + $0x18] sm:$0xff]
        %v1420 = vld [vmem:[%s1415 + $0x20] sm:$0xff]
        %v1421 = vld [vmem:[%s1415 + $0x28] sm:$0xff]
        %v1422 = vld [vmem:[%s1415 + $0x30] sm:$0xff]
        %v1423 = vld [vmem:[%s1415 + $0x38] sm:$0xff]
        %v1424 = vld [vmem:[%s1415 + $0x40] sm:$0xff]
        %v1425 = vld [vmem:[%s1415 + $0x48] sm:$0xff]
        %v1426 = vld [vmem:[%s1415 + $0x50] sm:$0xff]
        %v1427 = vld [vmem:[%s1415 + $0x58] sm:$0xff]
        %v1428 = vld [vmem:[%s1415 + $0x60] sm:$0xff]
        %v1429 = vld [vmem:[%s1415 + $0x68] sm:$0xff]
        %v1430 = vld [vmem:[%s1415 + $0x70] sm:$0xff]
        %v1431 = vld [vmem:[%s1415 + $0x78] sm:$0xff]
        %1432 = vmatprep.subr.mxu0 0.0
        %1433 = vmatpush1.msra.mxu0 %v1416
        %1434 = vmatprep.subr.mxu0 0.0
        %1435 = vmatpush1.msra.mxu0 %v1417
        %1436 = vmatprep.subr.mxu0 0.0
        %1437 = vmatpush1.msra.mxu0 %v1418
        %1438 = vmatprep.subr.mxu0 0.0
        %1439 = vmatpush1.msra.mxu0 %v1419
        %1440 = vmatprep.subr.mxu0 0.0
        %1441 = vmatpush1.msra.mxu0 %v1420
        %1442 = vmatprep.subr.mxu0 0.0
        %1443 = vmatpush1.msra.mxu0 %v1421
        %1444 = vmatprep.subr.mxu0 0.0
        %1445 = vmatpush1.msra.mxu0 %v1422
        %1446 = vmatprep.subr.mxu0 0.0
        %1447 = vmatpush1.msra.mxu0 %v1423
        %1448 = vmatprep.subr.mxu0 0.0
        %1449 = vmatpush1.msra.mxu0 %v1424
        %1450 = vmatprep.subr.mxu0 0.0
        %1451 = vmatpush1.msra.mxu0 %v1425
        %1452 = vmatprep.subr.mxu0 0.0
        %1453 = vmatpush1.msra.mxu0 %v1426
        %1454 = vmatprep.subr.mxu0 0.0
        %1455 = vmatpush1.msra.mxu0 %v1427
        %1456 = vmatprep.subr.mxu0 0.0
        %1457 = vmatpush1.msra.mxu0 %v1428
        %1458 = vmatprep.subr.mxu0 0.0
        %1459 = vmatpush1.msra.mxu0 %v1429
        %1460 = vmatprep.subr.mxu0 0.0
        %1461 = vmatpush1.msra.mxu0 %v1430
        %1462 = vmatprep.subr.mxu0 0.0
        %1463 = vmatpush1.msra.mxu0 %v1431
        %1464 = vmatprep.subr.mxu0 0.0
        %1465 = vmatpush1.msra.mxu0 0.0
        %1466 = vmatprep.subr.mxu0 0.0
        %1467 = vmatpush1.msra.mxu0 0.0
        %1468 = vmatprep.subr.mxu0 0.0
        %1469 = vmatpush1.msra.mxu0 0.0
        %1470 = vmatprep.subr.mxu0 0.0
        %1471 = vmatpush1.msra.mxu0 0.0
        %1472 = vmatprep.subr.mxu0 0.0
        %1473 = vmatpush1.msra.mxu0 0.0
        %1474 = vmatprep.subr.mxu0 0.0
        %1475 = vmatpush1.msra.mxu0 0.0
        %1476 = vmatprep.subr.mxu0 0.0
        %1477 = vmatpush1.msra.mxu0 0.0
        %1478 = vmatprep.subr.mxu0 0.0
        %1479 = vmatpush1.msra.mxu0 0.0
        %1480 = vmatprep.subr.mxu0 0.0
        %1481 = vmatpush1.msra.mxu0 0.0
        %1482 = vmatprep.subr.mxu0 0.0
        %1483 = vmatpush1.msra.mxu0 0.0
        %1484 = vmatprep.subr.mxu0 0.0
        %1485 = vmatpush1.msra.mxu0 0.0
        %1486 = vmatprep.subr.mxu0 0.0
        %1487 = vmatpush1.msra.mxu0 0.0
        %1488 = vmatprep.subr.mxu0 0.0
        %1489 = vmatpush1.msra.mxu0 0.0
        %1490 = vmatprep.subr.mxu0 0.0
        %1491 = vmatpush1.msra.mxu0 0.0
        %1492 = vmatprep.subr.mxu0 0.0
        %1493 = vmatpush1.msra.mxu0 0.0
        %1494 = vmatprep.subr.mxu0 0.0
        %1495 = vmatpush1.msra.mxu0 0.0
        %1496 = vmatprep.mubr.f32.mxu0 0.0
        %1497 = vmatmul.mubr.f32.gmra.mrb[0].mxu0 %v1413
        %v1498 = vpop.f32.mrb[0].mxu0
        %v1499 = vadd.f32 0.0, %v1498
        %v1500 = vpop.f32.mrb[0].mxu0
        %1501 = vmatprep.mubr.f32.mxu0 0.0
        %1502 = vmatmul.mubr.f32.gmra.mrb[0].mxu0 %v1414
        %v1503 = vpop.f32.mrb[0].mxu0
        %v1504 = vadd.f32 0.0, %v1503
        %v1505 = vpop.f32.mrb[0].mxu0
        %1506 = vdwg.mxu0
        %1507 = vmatprep.subr.mxu0 0.0
        %1508 = vmatpush1.msra.mxu0 %v1397
        %1509 = vmatprep.subr.mxu0 0.0
        %1510 = vmatpush1.msra.mxu0 %v1398
        %1511 = vmatprep.subr.mxu0 0.0
        %1512 = vmatpush1.msra.mxu0 %v1399
        %1513 = vmatprep.subr.mxu0 0.0
        %1514 = vmatpush1.msra.mxu0 %v1400
        %1515 = vmatprep.subr.mxu0 0.0
        %1516 = vmatpush1.msra.mxu0 %v1401
        %1517 = vmatprep.subr.mxu0 0.0
        %1518 = vmatpush1.msra.mxu0 %v1402
        %1519 = vmatprep.subr.mxu0 0.0
        %1520 = vmatpush1.msra.mxu0 %v1403
        %1521 = vmatprep.subr.mxu0 0.0
        %1522 = vmatpush1.msra.mxu0 %v1404
        %1523 = vmatprep.subr.mxu0 0.0
        %1524 = vmatpush1.msra.mxu0 %v1405
        %1525 = vmatprep.subr.mxu0 0.0
        %1526 = vmatpush1.msra.mxu0 %v1406
        %1527 = vmatprep.subr.mxu0 0.0
        %1528 = vmatpush1.msra.mxu0 %v1407
        %1529 = vmatprep.subr.mxu0 0.0
        %1530 = vmatpush1.msra.mxu0 %v1408
        %1531 = vmatprep.subr.mxu0 0.0
        %1532 = vmatpush1.msra.mxu0 %v1409
        %1533 = vmatprep.subr.mxu0 0.0
        %1534 = vmatpush1.msra.mxu0 %v1410
        %1535 = vmatprep.subr.mxu0 0.0
        %1536 = vmatpush1.msra.mxu0 %v1411
        %1537 = vmatprep.subr.mxu0 0.0
        %1538 = vmatpush1.msra.mxu0 %v1412
        %1539 = vmatprep.subr.mxu0 0.0
        %1540 = vmatpush1.msra.mxu0 0.0
        %1541 = vmatprep.subr.mxu0 0.0
        %1542 = vmatpush1.msra.mxu0 0.0
        %1543 = vmatprep.subr.mxu0 0.0
        %1544 = vmatpush1.msra.mxu0 0.0
        %1545 = vmatprep.subr.mxu0 0.0
        %1546 = vmatpush1.msra.mxu0 0.0
        %1547 = vmatprep.subr.mxu0 0.0
        %1548 = vmatpush1.msra.mxu0 0.0
        %1549 = vmatprep.subr.mxu0 0.0
        %1550 = vmatpush1.msra.mxu0 0.0
        %1551 = vmatprep.subr.mxu0 0.0
        %1552 = vmatpush1.msra.mxu0 0.0
        %1553 = vmatprep.subr.mxu0 0.0
        %1554 = vmatpush1.msra.mxu0 0.0
        %1555 = vmatprep.subr.mxu0 0.0
        %1556 = vmatpush1.msra.mxu0 0.0
        %1557 = vmatprep.subr.mxu0 0.0
        %1558 = vmatpush1.msra.mxu0 0.0
        %1559 = vmatprep.subr.mxu0 0.0
        %1560 = vmatpush1.msra.mxu0 0.0
        %1561 = vmatprep.subr.mxu0 0.0
        %1562 = vmatpush1.msra.mxu0 0.0
        %1563 = vmatprep.subr.mxu0 0.0
        %1564 = vmatpush1.msra.mxu0 0.0
        %1565 = vmatprep.subr.mxu0 0.0
        %1566 = vmatpush1.msra.mxu0 0.0
        %1567 = vmatprep.subr.mxu0 0.0
        %1568 = vmatpush1.msra.mxu0 0.0
        %1569 = vmatprep.subr.mxu0 0.0
        %1570 = vmatpush1.msra.mxu0 0.0
        %1571 = vmatprep.mubr.f32.mxu0 0.0
        %1572 = vmatmul.mubr.f32.gmra.mrb[0].mxu0 %v1395
        %v1573 = vpop.f32.mrb[0].mxu0
        %v1574 = vadd.f32 %v1499, %v1573
        %v1575 = vpop.f32.mrb[0].mxu0
        %1576 = vmatprep.mubr.f32.mxu0 0.0
        %1577 = vmatmul.mubr.f32.gmra.mrb[0].mxu0 %v1396
        %v1578 = vpop.f32.mrb[0].mxu0
        %v1579 = vadd.f32 %v1504, %v1578
        %v1580 = vpop.f32.mrb[0].mxu0
        %1581 = vdwg.mxu0
        %v1582 = vld [vmem:[%s10] sm:$0x1]
        %v1584 = vlaneseq
        %v1585 = vshrl.u32 %v1584, 7
        %v1586 = vsub.s32 0, %v1585
        %v1587 = vrot.slane %v1582, %v1586
        %v1589 = vadd.f32 %v1574, %v1587
        %v1590 = vadd.f32 %v1579, %v1587
        %v1591 = vmax.f32 %v1589, 0.0
        %v1592 = vmax.f32 %v1590, 0.0
        %v1593 = vld [vmem:[#allocation2 + $0x10] sm:$0xff]
        %v1594 = vld [vmem:[#allocation2 + $0x18] sm:$0xff]
        %v1595 = vadd.f32 %v1591, %v1593
        %v1596 = vadd.f32 %v1592, %v1594
        %v1597 = vmax.f32 %v1595, 0.0
        %v1598 = vmax.f32 %v1596, 0.0
        %1599 = vst [vmem:[#allocation2 + $0x10] sm:$0xff] %v1597
        %1600 = vst [vmem:[#allocation2 + $0x18] sm:$0xff] %v1598
        %v1601 = vld [vmem:[#allocation2 + $0xc] sm:$0xff]
        %v1602 = vld [vmem:[#allocation2 + $0x14] sm:$0xff]
        %v1603 = vld [vmem:[#allocation15] sm:$0xff]
        %v1604 = vld [vmem:[#allocation15 + $0x8] sm:$0xff]
        %v1605 = vld [vmem:[#allocation15 + $0x10] sm:$0xff]
        %v1606 = vld [vmem:[#allocation15 + $0x18] sm:$0xff]
        %v1607 = vld [vmem:[#allocation15 + $0x20] sm:$0xff]
        %v1608 = vld [vmem:[#allocation15 + $0x28] sm:$0xff]
        %v1609 = vld [vmem:[#allocation15 + $0x30] sm:$0xff]
        %v1610 = vld [vmem:[#allocation15 + $0x38] sm:$0xff]
        %v1611 = vld [vmem:[#allocation15 + $0x40] sm:$0xff]
        %v1612 = vld [vmem:[#allocation15 + $0x48] sm:$0xff]
        %v1613 = vld [vmem:[#allocation15 + $0x50] sm:$0xff]
        %v1614 = vld [vmem:[#allocation15 + $0x58] sm:$0xff]
        %v1615 = vld [vmem:[#allocation15 + $0x60] sm:$0xff]
        %v1616 = vld [vmem:[#allocation15 + $0x68] sm:$0xff]
        %v1617 = vld [vmem:[#allocation15 + $0x70] sm:$0xff]
        %v1618 = vld [vmem:[#allocation15 + $0x78] sm:$0xff]
        %v1619 = vld [vmem:[#allocation2 + $0x10] sm:$0xff]
        %v1620 = vld [vmem:[#allocation2 + $0x18] sm:$0xff]
        %s1621 = scalar_lea.vmem [#allocation15], 128
        %v1622 = vld [vmem:[%s1621] sm:$0xff]
        %v1623 = vld [vmem:[%s1621 + $0x8] sm:$0xff]
        %v1624 = vld [vmem:[%s1621 + $0x10] sm:$0xff]
        %v1625 = vld [vmem:[%s1621 + $0x18] sm:$0xff]
        %v1626 = vld [vmem:[%s1621 + $0x20] sm:$0xff]
        %v1627 = vld [vmem:[%s1621 + $0x28] sm:$0xff]
        %v1628 = vld [vmem:[%s1621 + $0x30] sm:$0xff]
        %v1629 = vld [vmem:[%s1621 + $0x38] sm:$0xff]
        %v1630 = vld [vmem:[%s1621 + $0x40] sm:$0xff]
        %v1631 = vld [vmem:[%s1621 + $0x48] sm:$0xff]
        %v1632 = vld [vmem:[%s1621 + $0x50] sm:$0xff]
        %v1633 = vld [vmem:[%s1621 + $0x58] sm:$0xff]
        %v1634 = vld [vmem:[%s1621 + $0x60] sm:$0xff]
        %v1635 = vld [vmem:[%s1621 + $0x68] sm:$0xff]
        %v1636 = vld [vmem:[%s1621 + $0x70] sm:$0xff]
        %v1637 = vld [vmem:[%s1621 + $0x78] sm:$0xff]
        %1638 = vmatprep.subr.mxu0 0.0
        %1639 = vmatpush1.msra.mxu0 %v1622
        %1640 = vmatprep.subr.mxu0 0.0
        %1641 = vmatpush1.msra.mxu0 %v1623
        %1642 = vmatprep.subr.mxu0 0.0
        %1643 = vmatpush1.msra.mxu0 %v1624
        %1644 = vmatprep.subr.mxu0 0.0
        %1645 = vmatpush1.msra.mxu0 %v1625
        %1646 = vmatprep.subr.mxu0 0.0
        %1647 = vmatpush1.msra.mxu0 %v1626
        %1648 = vmatprep.subr.mxu0 0.0
        %1649 = vmatpush1.msra.mxu0 %v1627
        %1650 = vmatprep.subr.mxu0 0.0
        %1651 = vmatpush1.msra.mxu0 %v1628
        %1652 = vmatprep.subr.mxu0 0.0
        %1653 = vmatpush1.msra.mxu0 %v1629
        %1654 = vmatprep.subr.mxu0 0.0
        %1655 = vmatpush1.msra.mxu0 %v1630
        %1656 = vmatprep.subr.mxu0 0.0
        %1657 = vmatpush1.msra.mxu0 %v1631
        %1658 = vmatprep.subr.mxu0 0.0
        %1659 = vmatpush1.msra.mxu0 %v1632
        %1660 = vmatprep.subr.mxu0 0.0
        %1661 = vmatpush1.msra.mxu0 %v1633
        %1662 = vmatprep.subr.mxu0 0.0
        %1663 = vmatpush1.msra.mxu0 %v1634
        %1664 = vmatprep.subr.mxu0 0.0
        %1665 = vmatpush1.msra.mxu0 %v1635
        %1666 = vmatprep.subr.mxu0 0.0
        %1667 = vmatpush1.msra.mxu0 %v1636
        %1668 = vmatprep.subr.mxu0 0.0
        %1669 = vmatpush1.msra.mxu0 %v1637
        %1670 = vmatprep.subr.mxu0 0.0
        %1671 = vmatpush1.msra.mxu0 0.0
        %1672 = vmatprep.subr.mxu0 0.0
        %1673 = vmatpush1.msra.mxu0 0.0
        %1674 = vmatprep.subr.mxu0 0.0
        %1675 = vmatpush1.msra.mxu0 0.0
        %1676 = vmatprep.subr.mxu0 0.0
        %1677 = vmatpush1.msra.mxu0 0.0
        %1678 = vmatprep.subr.mxu0 0.0
        %1679 = vmatpush1.msra.mxu0 0.0
        %1680 = vmatprep.subr.mxu0 0.0
        %1681 = vmatpush1.msra.mxu0 0.0
        %1682 = vmatprep.subr.mxu0 0.0
        %1683 = vmatpush1.msra.mxu0 0.0
        %1684 = vmatprep.subr.mxu0 0.0
        %1685 = vmatpush1.msra.mxu0 0.0
        %1686 = vmatprep.subr.mxu0 0.0
        %1687 = vmatpush1.msra.mxu0 0.0
        %1688 = vmatprep.subr.mxu0 0.0
        %1689 = vmatpush1.msra.mxu0 0.0
        %1690 = vmatprep.subr.mxu0 0.0
        %1691 = vmatpush1.msra.mxu0 0.0
        %1692 = vmatprep.subr.mxu0 0.0
        %1693 = vmatpush1.msra.mxu0 0.0
        %1694 = vmatprep.subr.mxu0 0.0
        %1695 = vmatpush1.msra.mxu0 0.0
        %1696 = vmatprep.subr.mxu0 0.0
        %1697 = vmatpush1.msra.mxu0 0.0
        %1698 = vmatprep.subr.mxu0 0.0
        %1699 = vmatpush1.msra.mxu0 0.0
        %1700 = vmatprep.subr.mxu0 0.0
        %1701 = vmatpush1.msra.mxu0 0.0
        %1702 = vmatprep.mubr.f32.mxu0 0.0
        %1703 = vmatmul.mubr.f32.gmra.mrb[0].mxu0 %v1619
        %v1704 = vpop.f32.mrb[0].mxu0
        %v1705 = vadd.f32 0.0, %v1704
        %v1706 = vpop.f32.mrb[0].mxu0
        %1707 = vmatprep.mubr.f32.mxu0 0.0
        %1708 = vmatmul.mubr.f32.gmra.mrb[0].mxu0 %v1620
        %v1709 = vpop.f32.mrb[0].mxu0
        %v1710 = vadd.f32 0.0, %v1709
        %v1711 = vpop.f32.mrb[0].mxu0
        %1712 = vdwg.mxu0
        %1713 = vmatprep.subr.mxu0 0.0
        %1714 = vmatpush1.msra.mxu0 %v1603
        %1715 = vmatprep.subr.mxu0 0.0
        %1716 = vmatpush1.msra.mxu0 %v1604
        %1717 = vmatprep.subr.mxu0 0.0
        %1718 = vmatpush1.msra.mxu0 %v1605
        %1719 = vmatprep.subr.mxu0 0.0
        %1720 = vmatpush1.msra.mxu0 %v1606
        %1721 = vmatprep.subr.mxu0 0.0
        %1722 = vmatpush1.msra.mxu0 %v1607
        %1723 = vmatprep.subr.mxu0 0.0
        %1724 = vmatpush1.msra.mxu0 %v1608
        %1725 = vmatprep.subr.mxu0 0.0
        %1726 = vmatpush1.msra.mxu0 %v1609
        %1727 = vmatprep.subr.mxu0 0.0
        %1728 = vmatpush1.msra.mxu0 %v1610
        %1729 = vmatprep.subr.mxu0 0.0
        %1730 = vmatpush1.msra.mxu0 %v1611
        %1731 = vmatprep.subr.mxu0 0.0
        %1732 = vmatpush1.msra.mxu0 %v1612
        %1733 = vmatprep.subr.mxu0 0.0
        %1734 = vmatpush1.msra.mxu0 %v1613
        %1735 = vmatprep.subr.mxu0 0.0
        %1736 = vmatpush1.msra.mxu0 %v1614
        %1737 = vmatprep.subr.mxu0 0.0
        %1738 = vmatpush1.msra.mxu0 %v1615
        %1739 = vmatprep.subr.mxu0 0.0
        %1740 = vmatpush1.msra.mxu0 %v1616
        %1741 = vmatprep.subr.mxu0 0.0
        %1742 = vmatpush1.msra.mxu0 %v1617
        %1743 = vmatprep.subr.mxu0 0.0
        %1744 = vmatpush1.msra.mxu0 %v1618
        %1745 = vmatprep.subr.mxu0 0.0
        %1746 = vmatpush1.msra.mxu0 0.0
        %1747 = vmatprep.subr.mxu0 0.0
        %1748 = vmatpush1.msra.mxu0 0.0
        %1749 = vmatprep.subr.mxu0 0.0
        %1750 = vmatpush1.msra.mxu0 0.0
        %1751 = vmatprep.subr.mxu0 0.0
        %1752 = vmatpush1.msra.mxu0 0.0
        %1753 = vmatprep.subr.mxu0 0.0
        %1754 = vmatpush1.msra.mxu0 0.0
        %1755 = vmatprep.subr.mxu0 0.0
        %1756 = vmatpush1.msra.mxu0 0.0
        %1757 = vmatprep.subr.mxu0 0.0
        %1758 = vmatpush1.msra.mxu0 0.0
        %1759 = vmatprep.subr.mxu0 0.0
        %1760 = vmatpush1.msra.mxu0 0.0
        %1761 = vmatprep.subr.mxu0 0.0
        %1762 = vmatpush1.msra.mxu0 0.0
        %1763 = vmatprep.subr.mxu0 0.0
        %1764 = vmatpush1.msra.mxu0 0.0
        %1765 = vmatprep.subr.mxu0 0.0
        %1766 = vmatpush1.msra.mxu0 0.0
        %1767 = vmatprep.subr.mxu0 0.0
        %1768 = vmatpush1.msra.mxu0 0.0
        %1769 = vmatprep.subr.mxu0 0.0
        %1770 = vmatpush1.msra.mxu0 0.0
        %1771 = vmatprep.subr.mxu0 0.0
        %1772 = vmatpush1.msra.mxu0 0.0
        %1773 = vmatprep.subr.mxu0 0.0
        %1774 = vmatpush1.msra.mxu0 0.0
        %1775 = vmatprep.subr.mxu0 0.0
        %1776 = vmatpush1.msra.mxu0 0.0
        %1777 = vmatprep.mubr.f32.mxu0 0.0
        %1778 = vmatmul.mubr.f32.gmra.mrb[0].mxu0 %v1601
        %v1779 = vpop.f32.mrb[0].mxu0
        %v1780 = vadd.f32 %v1705, %v1779
        %v1781 = vpop.f32.mrb[0].mxu0
        %1782 = vmatprep.mubr.f32.mxu0 0.0
        %1783 = vmatmul.mubr.f32.gmra.mrb[0].mxu0 %v1602
        %v1784 = vpop.f32.mrb[0].mxu0
        %v1785 = vadd.f32 %v1710, %v1784
        %v1786 = vpop.f32.mrb[0].mxu0
        %1787 = vdwg.mxu0
        %v1788 = vld [vmem:[%s12] sm:$0x1]
        %v1790 = vlaneseq
        %v1791 = vshrl.u32 %v1790, 7
        %v1792 = vsub.s32 0, %v1791
        %v1793 = vrot.slane %v1788, %v1792
        %v1795 = vadd.f32 %v1780, %v1793
        %v1796 = vadd.f32 %v1785, %v1793
        %v1797 = vmax.f32 %v1795, 0.0
        %v1798 = vmax.f32 %v1796, 0.0
        %1799 = vst [vmem:[#allocation3 + $0x10] sm:$0xff] %v1797
        %1800 = vst [vmem:[#allocation3 + $0x18] sm:$0xff] %v1798
        %v1801 = vld [vmem:[#allocation3 + $0xc] sm:$0xff]
        %v1802 = vld [vmem:[#allocation3 + $0x14] sm:$0xff]
        %v1803 = vld [vmem:[#allocation16] sm:$0xff]
        %v1804 = vld [vmem:[#allocation16 + $0x8] sm:$0xff]
        %v1805 = vld [vmem:[#allocation16 + $0x10] sm:$0xff]
        %v1806 = vld [vmem:[#allocation16 + $0x18] sm:$0xff]
        %v1807 = vld [vmem:[#allocation16 + $0x20] sm:$0xff]
        %v1808 = vld [vmem:[#allocation16 + $0x28] sm:$0xff]
        %v1809 = vld [vmem:[#allocation16 + $0x30] sm:$0xff]
        %v1810 = vld [vmem:[#allocation16 + $0x38] sm:$0xff]
        %v1811 = vld [vmem:[#allocation16 + $0x40] sm:$0xff]
        %v1812 = vld [vmem:[#allocation16 + $0x48] sm:$0xff]
        %v1813 = vld [vmem:[#allocation16 + $0x50] sm:$0xff]
        %v1814 = vld [vmem:[#allocation16 + $0x58] sm:$0xff]
        %v1815 = vld [vmem:[#allocation16 + $0x60] sm:$0xff]
        %v1816 = vld [vmem:[#allocation16 + $0x68] sm:$0xff]
        %v1817 = vld [vmem:[#allocation16 + $0x70] sm:$0xff]
        %v1818 = vld [vmem:[#allocation16 + $0x78] sm:$0xff]
        %v1819 = vld [vmem:[#allocation3 + $0x10] sm:$0xff]
        %v1820 = vld [vmem:[#allocation3 + $0x18] sm:$0xff]
        %s1821 = scalar_lea.vmem [#allocation16], 128
        %v1822 = vld [vmem:[%s1821] sm:$0xff]
        %v1823 = vld [vmem:[%s1821 + $0x8] sm:$0xff]
        %v1824 = vld [vmem:[%s1821 + $0x10] sm:$0xff]
        %v1825 = vld [vmem:[%s1821 + $0x18] sm:$0xff]
        %v1826 = vld [vmem:[%s1821 + $0x20] sm:$0xff]
        %v1827 = vld [vmem:[%s1821 + $0x28] sm:$0xff]
        %v1828 = vld [vmem:[%s1821 + $0x30] sm:$0xff]
        %v1829 = vld [vmem:[%s1821 + $0x38] sm:$0xff]
        %v1830 = vld [vmem:[%s1821 + $0x40] sm:$0xff]
        %v1831 = vld [vmem:[%s1821 + $0x48] sm:$0xff]
        %v1832 = vld [vmem:[%s1821 + $0x50] sm:$0xff]
        %v1833 = vld [vmem:[%s1821 + $0x58] sm:$0xff]
        %v1834 = vld [vmem:[%s1821 + $0x60] sm:$0xff]
        %v1835 = vld [vmem:[%s1821 + $0x68] sm:$0xff]
        %v1836 = vld [vmem:[%s1821 + $0x70] sm:$0xff]
        %v1837 = vld [vmem:[%s1821 + $0x78] sm:$0xff]
        %1838 = vmatprep.subr.mxu0 0.0
        %1839 = vmatpush1.msra.mxu0 %v1822
        %1840 = vmatprep.subr.mxu0 0.0
        %1841 = vmatpush1.msra.mxu0 %v1823
        %1842 = vmatprep.subr.mxu0 0.0
        %1843 = vmatpush1.msra.mxu0 %v1824
        %1844 = vmatprep.subr.mxu0 0.0
        %1845 = vmatpush1.msra.mxu0 %v1825
        %1846 = vmatprep.subr.mxu0 0.0
        %1847 = vmatpush1.msra.mxu0 %v1826
        %1848 = vmatprep.subr.mxu0 0.0
        %1849 = vmatpush1.msra.mxu0 %v1827
        %1850 = vmatprep.subr.mxu0 0.0
        %1851 = vmatpush1.msra.mxu0 %v1828
        %1852 = vmatprep.subr.mxu0 0.0
        %1853 = vmatpush1.msra.mxu0 %v1829
        %1854 = vmatprep.subr.mxu0 0.0
        %1855 = vmatpush1.msra.mxu0 %v1830
        %1856 = vmatprep.subr.mxu0 0.0
        %1857 = vmatpush1.msra.mxu0 %v1831
        %1858 = vmatprep.subr.mxu0 0.0
        %1859 = vmatpush1.msra.mxu0 %v1832
        %1860 = vmatprep.subr.mxu0 0.0
        %1861 = vmatpush1.msra.mxu0 %v1833
        %1862 = vmatprep.subr.mxu0 0.0
        %1863 = vmatpush1.msra.mxu0 %v1834
        %1864 = vmatprep.subr.mxu0 0.0
        %1865 = vmatpush1.msra.mxu0 %v1835
        %1866 = vmatprep.subr.mxu0 0.0
        %1867 = vmatpush1.msra.mxu0 %v1836
        %1868 = vmatprep.subr.mxu0 0.0
        %1869 = vmatpush1.msra.mxu0 %v1837
        %1870 = vmatprep.subr.mxu0 0.0
        %1871 = vmatpush1.msra.mxu0 0.0
        %1872 = vmatprep.subr.mxu0 0.0
        %1873 = vmatpush1.msra.mxu0 0.0
        %1874 = vmatprep.subr.mxu0 0.0
        %1875 = vmatpush1.msra.mxu0 0.0
        %1876 = vmatprep.subr.mxu0 0.0
        %1877 = vmatpush1.msra.mxu0 0.0
        %1878 = vmatprep.subr.mxu0 0.0
        %1879 = vmatpush1.msra.mxu0 0.0
        %1880 = vmatprep.subr.mxu0 0.0
        %1881 = vmatpush1.msra.mxu0 0.0
        %1882 = vmatprep.subr.mxu0 0.0
        %1883 = vmatpush1.msra.mxu0 0.0
        %1884 = vmatprep.subr.mxu0 0.0
        %1885 = vmatpush1.msra.mxu0 0.0
        %1886 = vmatprep.subr.mxu0 0.0
        %1887 = vmatpush1.msra.mxu0 0.0
        %1888 = vmatprep.subr.mxu0 0.0
        %1889 = vmatpush1.msra.mxu0 0.0
        %1890 = vmatprep.subr.mxu0 0.0
        %1891 = vmatpush1.msra.mxu0 0.0
        %1892 = vmatprep.subr.mxu0 0.0
        %1893 = vmatpush1.msra.mxu0 0.0
        %1894 = vmatprep.subr.mxu0 0.0
        %1895 = vmatpush1.msra.mxu0 0.0
        %1896 = vmatprep.subr.mxu0 0.0
        %1897 = vmatpush1.msra.mxu0 0.0
        %1898 = vmatprep.subr.mxu0 0.0
        %1899 = vmatpush1.msra.mxu0 0.0
        %1900 = vmatprep.subr.mxu0 0.0
        %1901 = vmatpush1.msra.mxu0 0.0
        %1902 = vmatprep.mubr.f32.mxu0 0.0
        %1903 = vmatmul.mubr.f32.gmra.mrb[0].mxu0 %v1819
        %v1904 = vpop.f32.mrb[0].mxu0
        %v1905 = vadd.f32 0.0, %v1904
        %v1906 = vpop.f32.mrb[0].mxu0
        %1907 = vmatprep.mubr.f32.mxu0 0.0
        %1908 = vmatmul.mubr.f32.gmra.mrb[0].mxu0 %v1820
        %v1909 = vpop.f32.mrb[0].mxu0
        %v1910 = vadd.f32 0.0, %v1909
        %v1911 = vpop.f32.mrb[0].mxu0
        %1912 = vdwg.mxu0
        %1913 = vmatprep.subr.mxu0 0.0
        %1914 = vmatpush1.msra.mxu0 %v1803
        %1915 = vmatprep.subr.mxu0 0.0
        %1916 = vmatpush1.msra.mxu0 %v1804
        %1917 = vmatprep.subr.mxu0 0.0
        %1918 = vmatpush1.msra.mxu0 %v1805
        %1919 = vmatprep.subr.mxu0 0.0
        %1920 = vmatpush1.msra.mxu0 %v1806
        %1921 = vmatprep.subr.mxu0 0.0
        %1922 = vmatpush1.msra.mxu0 %v1807
        %1923 = vmatprep.subr.mxu0 0.0
        %1924 = vmatpush1.msra.mxu0 %v1808
        %1925 = vmatprep.subr.mxu0 0.0
        %1926 = vmatpush1.msra.mxu0 %v1809
        %1927 = vmatprep.subr.mxu0 0.0
        %1928 = vmatpush1.msra.mxu0 %v1810
        %1929 = vmatprep.subr.mxu0 0.0
        %1930 = vmatpush1.msra.mxu0 %v1811
        %1931 = vmatprep.subr.mxu0 0.0
        %1932 = vmatpush1.msra.mxu0 %v1812
        %1933 = vmatprep.subr.mxu0 0.0
        %1934 = vmatpush1.msra.mxu0 %v1813
        %1935 = vmatprep.subr.mxu0 0.0
        %1936 = vmatpush1.msra.mxu0 %v1814
        %1937 = vmatprep.subr.mxu0 0.0
        %1938 = vmatpush1.msra.mxu0 %v1815
        %1939 = vmatprep.subr.mxu0 0.0
        %1940 = vmatpush1.msra.mxu0 %v1816
        %1941 = vmatprep.subr.mxu0 0.0
        %1942 = vmatpush1.msra.mxu0 %v1817
        %1943 = vmatprep.subr.mxu0 0.0
        %1944 = vmatpush1.msra.mxu0 %v1818
        %1945 = vmatprep.subr.mxu0 0.0
        %1946 = vmatpush1.msra.mxu0 0.0
        %1947 = vmatprep.subr.mxu0 0.0
        %1948 = vmatpush1.msra.mxu0 0.0
        %1949 = vmatprep.subr.mxu0 0.0
        %1950 = vmatpush1.msra.mxu0 0.0
        %1951 = vmatprep.subr.mxu0 0.0
        %1952 = vmatpush1.msra.mxu0 0.0
        %1953 = vmatprep.subr.mxu0 0.0
        %1954 = vmatpush1.msra.mxu0 0.0
        %1955 = vmatprep.subr.mxu0 0.0
        %1956 = vmatpush1.msra.mxu0 0.0
        %1957 = vmatprep.subr.mxu0 0.0
        %1958 = vmatpush1.msra.mxu0 0.0
        %1959 = vmatprep.subr.mxu0 0.0
        %1960 = vmatpush1.msra.mxu0 0.0
        %1961 = vmatprep.subr.mxu0 0.0
        %1962 = vmatpush1.msra.mxu0 0.0
        %1963 = vmatprep.subr.mxu0 0.0
        %1964 = vmatpush1.msra.mxu0 0.0
        %1965 = vmatprep.subr.mxu0 0.0
        %1966 = vmatpush1.msra.mxu0 0.0
        %1967 = vmatprep.subr.mxu0 0.0
        %1968 = vmatpush1.msra.mxu0 0.0
        %1969 = vmatprep.subr.mxu0 0.0
        %1970 = vmatpush1.msra.mxu0 0.0
        %1971 = vmatprep.subr.mxu0 0.0
        %1972 = vmatpush1.msra.mxu0 0.0
        %1973 = vmatprep.subr.mxu0 0.0
        %1974 = vmatpush1.msra.mxu0 0.0
        %1975 = vmatprep.subr.mxu0 0.0
        %1976 = vmatpush1.msra.mxu0 0.0
        %1977 = vmatprep.mubr.f32.mxu0 0.0
        %1978 = vmatmul.mubr.f32.gmra.mrb[0].mxu0 %v1801
        %v1979 = vpop.f32.mrb[0].mxu0
        %v1980 = vadd.f32 %v1905, %v1979
        %v1981 = vpop.f32.mrb[0].mxu0
        %1982 = vmatprep.mubr.f32.mxu0 0.0
        %1983 = vmatmul.mubr.f32.gmra.mrb[0].mxu0 %v1802
        %v1984 = vpop.f32.mrb[0].mxu0
        %v1985 = vadd.f32 %v1910, %v1984
        %v1986 = vpop.f32.mrb[0].mxu0
        %1987 = vdwg.mxu0
        %v1988 = vld [vmem:[%s14] sm:$0x1]
        %v1990 = vlaneseq
        %v1991 = vshrl.u32 %v1990, 7
        %v1992 = vsub.s32 0, %v1991
        %v1993 = vrot.slane %v1988, %v1992
        %v1995 = vadd.f32 %v1980, %v1993
        %v1996 = vadd.f32 %v1985, %v1993
        %v1997 = vmax.f32 %v1995, 0.0
        %v1998 = vmax.f32 %v1996, 0.0
        %v1999 = vld [vmem:[#allocation2 + $0x10] sm:$0xff]
        %v2000 = vld [vmem:[#allocation2 + $0x18] sm:$0xff]
        %v2001 = vld [vmem:[#allocation18] sm:$0xff]
        %v2002 = vld [vmem:[#allocation18 + $0x8] sm:$0xff]
        %v2003 = vld [vmem:[#allocation18 + $0x10] sm:$0xff]
        %v2004 = vld [vmem:[#allocation18 + $0x18] sm:$0xff]
        %v2005 = vld [vmem:[#allocation18 + $0x20] sm:$0xff]
        %v2006 = vld [vmem:[#allocation18 + $0x28] sm:$0xff]
        %v2007 = vld [vmem:[#allocation18 + $0x30] sm:$0xff]
        %v2008 = vld [vmem:[#allocation18 + $0x38] sm:$0xff]
        %v2009 = vld [vmem:[#allocation18 + $0x40] sm:$0xff]
        %v2010 = vld [vmem:[#allocation18 + $0x48] sm:$0xff]
        %v2011 = vld [vmem:[#allocation18 + $0x50] sm:$0xff]
        %v2012 = vld [vmem:[#allocation18 + $0x58] sm:$0xff]
        %v2013 = vld [vmem:[#allocation18 + $0x60] sm:$0xff]
        %v2014 = vld [vmem:[#allocation18 + $0x68] sm:$0xff]
        %v2015 = vld [vmem:[#allocation18 + $0x70] sm:$0xff]
        %v2016 = vld [vmem:[#allocation18 + $0x78] sm:$0xff]
        %v2017 = vld [vmem:[%s16] sm:$0x1]
        %v2019 = vlaneseq
        %v2020 = vshrl.u32 %v2019, 7
        %v2021 = vsub.s32 0, %v2020
        %v2022 = vrot.slane %v2017, %v2021
        %2024 = vmatprep.subr.mxu0 0.0
        %2025 = vmatpush1.msra.mxu0 %v2001
        %2026 = vmatprep.subr.mxu0 0.0
        %2027 = vmatpush1.msra.mxu0 %v2002
        %2028 = vmatprep.subr.mxu0 0.0
        %2029 = vmatpush1.msra.mxu0 %v2003
        %2030 = vmatprep.subr.mxu0 0.0
        %2031 = vmatpush1.msra.mxu0 %v2004
        %2032 = vmatprep.subr.mxu0 0.0
        %2033 = vmatpush1.msra.mxu0 %v2005
        %2034 = vmatprep.subr.mxu0 0.0
        %2035 = vmatpush1.msra.mxu0 %v2006
        %2036 = vmatprep.subr.mxu0 0.0
        %2037 = vmatpush1.msra.mxu0 %v2007
        %2038 = vmatprep.subr.mxu0 0.0
        %2039 = vmatpush1.msra.mxu0 %v2008
        %2040 = vmatprep.subr.mxu0 0.0
        %2041 = vmatpush1.msra.mxu0 %v2009
        %2042 = vmatprep.subr.mxu0 0.0
        %2043 = vmatpush1.msra.mxu0 %v2010
        %2044 = vmatprep.subr.mxu0 0.0
        %2045 = vmatpush1.msra.mxu0 %v2011
        %2046 = vmatprep.subr.mxu0 0.0
        %2047 = vmatpush1.msra.mxu0 %v2012
        %2048 = vmatprep.subr.mxu0 0.0
        %2049 = vmatpush1.msra.mxu0 %v2013
        %2050 = vmatprep.subr.mxu0 0.0
        %2051 = vmatpush1.msra.mxu0 %v2014
        %2052 = vmatprep.subr.mxu0 0.0
        %2053 = vmatpush1.msra.mxu0 %v2015
        %2054 = vmatprep.subr.mxu0 0.0
        %2055 = vmatpush1.msra.mxu0 %v2016
        %2056 = vmatprep.subr.mxu0 0.0
        %2057 = vmatpush1.msra.mxu0 0.0
        %2058 = vmatprep.subr.mxu0 0.0
        %2059 = vmatpush1.msra.mxu0 0.0
        %2060 = vmatprep.subr.mxu0 0.0
        %2061 = vmatpush1.msra.mxu0 0.0
        %2062 = vmatprep.subr.mxu0 0.0
        %2063 = vmatpush1.msra.mxu0 0.0
        %2064 = vmatprep.subr.mxu0 0.0
        %2065 = vmatpush1.msra.mxu0 0.0
        %2066 = vmatprep.subr.mxu0 0.0
        %2067 = vmatpush1.msra.mxu0 0.0
        %2068 = vmatprep.subr.mxu0 0.0
        %2069 = vmatpush1.msra.mxu0 0.0
        %2070 = vmatprep.subr.mxu0 0.0
        %2071 = vmatpush1.msra.mxu0 0.0
        %2072 = vmatprep.subr.mxu0 0.0
        %2073 = vmatpush1.msra.mxu0 0.0
        %2074 = vmatprep.subr.mxu0 0.0
        %2075 = vmatpush1.msra.mxu0 0.0
        %2076 = vmatprep.subr.mxu0 0.0
        %2077 = vmatpush1.msra.mxu0 0.0
        %2078 = vmatprep.subr.mxu0 0.0
        %2079 = vmatpush1.msra.mxu0 0.0
        %2080 = vmatprep.subr.mxu0 0.0
        %2081 = vmatpush1.msra.mxu0 0.0
        %2082 = vmatprep.subr.mxu0 0.0
        %2083 = vmatpush1.msra.mxu0 0.0
        %2084 = vmatprep.subr.mxu0 0.0
        %2085 = vmatpush1.msra.mxu0 0.0
        %2086 = vmatprep.subr.mxu0 0.0
        %2087 = vmatpush1.msra.mxu0 0.0
        %2088 = vmatprep.mubr.f32.mxu0 0.0
        %2089 = vmatmul.mubr.f32.gmra.mrb[0].mxu0 %v1999
        %v2090 = vpop.f32.mrb[0].mxu0
        %v2091 = vadd.f32 %v2022, %v2090
        %v2092 = vpop.f32.mrb[0].mxu0
        %2093 = vmatprep.mubr.f32.mxu0 0.0
        %2094 = vmatmul.mubr.f32.gmra.mrb[0].mxu0 %v2000
        %v2095 = vpop.f32.mrb[0].mxu0
        %v2096 = vadd.f32 %v2022, %v2095
        %v2097 = vpop.f32.mrb[0].mxu0
        %2098 = vdwg.mxu0
        %v2099 = vadd.f32 %v1997, %v2091
        %v2100 = vadd.f32 %v1998, %v2096
        %v2101 = vmax.f32 %v2099, 0.0
        %v2102 = vmax.f32 %v2100, 0.0
        %2103 = vst [vmem:[%s682] sm:$0xff] %v2101
        %2104 = vst [vmem:[%s682 + $0x8] sm:$0xff] %v2102
        %s2105 = sand.u32 %s408, 1
        %s2106 = scalar_lea.sflag [#allocation6], %s2105
        %s2107 = sand.u32 %s408, 1
        %s2108 = smul.addr %s2107, 16
        %s2109 = scalar_lea.vmem [#allocation19], %s2108
        // Predicated region
        $region125: #{tpu_custom_call.1} parent=87 // pred_check
          %p2110 = pneg %p418
        $region126: #{tpu_custom_call.1} parent=87 // pred_check_branch
          %2112 = sbr.rel (%p2110) target = $region128
        $region127: #{tpu_custom_call.1} parent=87 // pred_region
          %s2114 = ssub.s32 256, 256
          %2115 = vsyncadd %s2106, %s2114
          %s2116 = smul.addr %s38, 2
          %s2117 = smul.addr %s2116, 128
          %s2118 = scalar_lea.hbm %s17, %s2117
          %s2119 = sshll.u32 %s2109, 4
          %s2120 = int_to_ptr.vmem [resolvable:$true] %s2119
          %2125 = dma.vmem_to_hbm [thread:$0]  %s2120, 256, %s2118, %s2106, 128, 128, 8
        $region128: #{tpu_custom_call.1} parent=87 // pred_fallthru
          _
      $region88: #{tpu_custom_call.1} parent=5 // pred_fallthru
        _
      %p2126 = scmp.le.s32.totalorder 2, %s33
      // Predicated region
      $region129: #{tpu_custom_call.1} parent=5 // pred_check
        %p2127 = pneg %p2126
      $region130: #{tpu_custom_call.1} parent=5 // pred_check_branch
        %2129 = sbr.rel (%p2127) target = $region132
      $region131: #{tpu_custom_call.1} parent=5 // pred_region
        %s2130 = ssub.s32 %s33, 2
        // Predicated region
        $region133: #{tpu_custom_call.1} parent=131 // pred_check
          %p2131 = pneg %p424
        $region134: #{tpu_custom_call.1} parent=131 // pred_check_branch
          %2133 = sbr.rel (%p2131) target = $region136
        $region135: #{tpu_custom_call.1} parent=131 // pred_region
          %s2134 = sand.u32 %s409, 1
          %s2135 = scalar_lea.sflag [#allocation6], %s2134
          %s2136 = sand.u32 %s409, 1
          %s2137 = smul.addr %s2136, 16
          %s2138 = scalar_lea.vmem [#allocation19], %s2137
          %2139 = dma.done %s2135, 256
        $region136: #{tpu_custom_call.1} parent=131 // pred_fallthru
          _
      $region132: #{tpu_custom_call.1} parent=5 // pred_fallthru
        _
    $region6: #{tpu_custom_call.1} parent=1 // loop_footer
      %s37 = sadd.s32 1, %s33
    $region7: #{tpu_custom_call.1} parent=1 // loop_footer_branch
      %32 = sbr.rel target = $region3
    $region8: #{tpu_custom_call.1} parent=1 // loop_exit
      _
    %2140 = vsyncpa [#allocation5], 1
    %s2141 = scalar_lea.sflag [#allocation5], 1
    %2142 = vsyncpa %s2141, 1
    %2143 = vsyncpa [#allocation8], 1
    %2144 = vsyncpa [#allocation11], 1
    %2145 = vsyncpa [#allocation14], 1
    %2146 = vsyncpa [#allocation17], 1
    %2147 = vsyncpa [#allocation6], 1
    %s2148 = scalar_lea.sflag [#allocation6], 1
    %2149 = vsyncpa %s2148, 1

</llo_original>
